<compile_context>
chip_gen: v7x
topology: tpu7x:2x2x1
jax: 0.10.0
libtpu: 0.0.40
codegen_flags: <defaults>
</compile_context>

<pallas_src>
import functools

import jax
import jax.numpy as jnp
from jax.experimental import pallas as pl
from jax.experimental.pallas import tpu as pltpu


# ----------------------------------------------------------------------------
# Fused AdaLN Pallas kernel
# ----------------------------------------------------------------------------
def _adaln_kernel(e_ref, dg_ref, sout_ref, vin_ref, vedge_ref, c_ref,
                  wl_ref, bl_ref, o_ref):
    """One (batch, i-tile) grid step.

    e_ref    : [tile_i, N, d_edge]  edge feats for this tile's rows i, all j
    dg_ref   : [tile_i, d_edge]     diagonal (self-edge) feats for rows i
    sout_ref : [1, N]               precomputed  diag(E)[j] . (W_out @ a2)
    vin_ref  : [1, d_edge]          W_in  @ a1  (folded)
    vedge_ref: [1, d_edge]          W_edge@ a3  (folded)
    c_ref    : [1, 1]               b_in.a1 + b_out.a2 + b_edge.a3 + b_a
    wl_ref   : [d_edge, 6*d_model]  final Linear weight
    bl_ref   : [1, 6*d_model]       final Linear bias
    o_ref    : [tile_i, 6*d_model]  lane-dense packed output slab
    """
    dg = dg_ref[...].astype(jnp.float32)                                    # [ti, de]

    # logits  s[i,j] = dg[i].v_in + s_out[j] + e[i,j].v_edge + c   (all f32;
    # e stays in its input dtype, the multiply by the f32 vector upcasts it)
    s_in = jnp.sum(dg * vin_ref[...], axis=-1, keepdims=True)               # [ti, 1]
    s_edge = jnp.sum(e_ref[...] * vedge_ref[...].reshape(1, 1, -1), axis=-1)  # [ti, N]
    s = s_edge + s_in + sout_ref[...] + c_ref[...]                          # [ti, N]

    # SiLU, then softmax over j (lane axis) — f32 throughout
    s = s * jax.nn.sigmoid(s)
    p = jnp.exp(s - jnp.max(s, axis=-1, keepdims=True))
    w = p / jnp.sum(p, axis=-1, keepdims=True)                              # [ti, N]

    # weighted aggregation of incoming edges + self features, then SiLU
    aggr = dg + jnp.sum(e_ref[...] * w[:, :, None], axis=1)                 # [ti, de]
    msg = aggr * jax.nn.sigmoid(aggr)

    # final projection to all 6 modulation vectors in one lane-dense store
    out = jnp.dot(msg, wl_ref[...], preferred_element_type=jnp.float32) + bl_ref[...]
    o_ref[...] = out.astype(o_ref.dtype)


# ----------------------------------------------------------------------------
# Per-generation VMEM plan + tile picker
# ----------------------------------------------------------------------------
def _is_multi_core_chip():
    """True on chips with >1 TensorCore sharing the grid (v7x)."""
    try:
        kind = jax.devices()[0].device_kind.lower()
    except Exception:
        return False
    return ("v7" in kind) or ("tpu7" in kind)


def _vmem_plan():
    """Returns (edge-slab budget bytes, vmem_limit_bytes) for this generation."""
    vmem_cap = None
    try:
        vmem_cap = int(pltpu.get_tpu_info().vmem_capacity_bytes)
    except Exception:
        vmem_cap = None
    if vmem_cap is None:
        try:
            kind = jax.devices()[0].device_kind.lower()
        except Exception:
            kind = ""
        vmem_cap = (64 << 20) if (("v7" in kind) or ("tpu7" in kind)) else (128 << 20)
    if vmem_cap <= (64 << 20):          # v7x: 64 MiB per TensorCore
        return 24 << 20, 52 << 20
    return 56 << 20, 104 << 20          # v5e / v6e: 128 MiB physical VMEM


def _pick_tile_i(n, d_edge, itemsize, budget_bytes):
    """Largest i-tile whose double-buffered edge slab fits the VMEM budget."""
    lanes = ((d_edge + 127) // 128) * 128      # lane padding: d_edge<128 -> 128 lanes
    subl = ((n + 7) // 8) * 8                  # sublane padding of the j axis
    row_bytes = subl * lanes * itemsize        # one i-row of the edge slab in VMEM
    max_rows = max(1, budget_bytes // (2 * row_bytes))   # double buffered
    if n <= max_rows:
        return n
    # Prefer a multiple of 128 (MXU row utilization of the final projection),
    # then fall back to multiples of 8 to keep the (8,128) tiling constraint.
    for step in (128, 8):
        t = (max_rows // step) * step
        while t >= step:
            if n % t == 0:
                return t
            t -= step
    return n                                   # fallback: whole-row block


# ----------------------------------------------------------------------------
# Wrapper
# ----------------------------------------------------------------------------
@functools.partial(jax.jit, static_argnames=("tile_i", "core_parallel"))
def adaln_forward(params, edge_feats, *, tile_i=None, core_parallel=None):
    b, n, n2, d_edge = edge_feats.shape
    assert n == n2, "edge_feats must be [B, N, N, d_edge]"
    wl, bl = params["linear"]
    d6 = wl.shape[1]                            # 6 * d_model
    itemsize = jnp.dtype(edge_feats.dtype).itemsize

    # ---- tiny XLA glue: diagonal extraction + exact weight folding ----------
    hp = jax.lax.Precision.HIGHEST
    dg = jnp.swapaxes(jnp.diagonal(edge_feats, axis1=1, axis2=2), -1, -2)   # [B,N,de]

    w_in, b_in = params["w_in"]
    w_out, b_out = params["w_out"]
    w_edge, b_edge = params["w_edge"]
    a_w, a_b = params["a"]                      # [3*de, 1], [1]
    a1, a2, a3 = a_w[:d_edge], a_w[d_edge:2 * d_edge], a_w[2 * d_edge:]
    v_in = (w_in @ a1).reshape(1, d_edge).astype(jnp.float32)               # row
    v_out = (w_out @ a2).astype(jnp.float32)                                # [de, 1]
    v_edge = (w_edge @ a3).reshape(1, d_edge).astype(jnp.float32)           # row
    c = (b_in @ a1 + b_out @ a2 + b_edge @ a3 + a_b).reshape(1, 1).astype(jnp.float32)
    # s_out[b, j] is identical for every i-tile of a batch: compute once here
    # instead of re-DMAing dgT and re-reducing it N/tile_i times per batch.
    s_out = jnp.einsum("bnd,dk->bkn", dg.astype(jnp.float32), v_out,
                       precision=hp)                                        # [B,1,N]

    edge_budget, vmem_limit = _vmem_plan()
    if tile_i is None:
        tile_i = _pick_tile_i(n, d_edge, itemsize, edge_budget)
    assert n % tile_i == 0, f"tile_i={tile_i} must divide n_nodes={n}"
    grid = (b, n // tile_i)

    if core_parallel is None:
        core_parallel = _is_multi_core_chip()
    if core_parallel:
        dim_sem = (pltpu.CORE_PARALLEL, pltpu.PARALLEL)   # split batches across v7x TCs
    else:
        dim_sem = ("parallel", "parallel")

    flops = (4 * b * n * n * d_edge                # edge score + weighted sum
             + 2 * b * n * d_edge * d6             # final projection
             + 4 * b * n * d_edge                  # s_in / folded vectors
             + 8 * b * n * n)                      # softmax / SiLU elementwise
    transcendentals = 2 * b * n * n + b * n * d_edge
    bytes_accessed = (b * n * n * d_edge * itemsize      # edge slab (dominant)
                      + b * n * d6 * 4                   # output
                      + b * n * d_edge * itemsize        # diagonal feats
                      + b * n * 4)                       # s_out

    out = pl.pallas_call(
        _adaln_kernel,
        out_shape=jax.ShapeDtypeStruct((b, n, d6), jnp.float32),
        grid=grid,
        in_specs=[
            pl.BlockSpec((None, tile_i, n, d_edge), lambda bi, ii: (bi, ii, 0, 0)),
            pl.BlockSpec((None, tile_i, d_edge), lambda bi, ii: (bi, ii, 0)),
            pl.BlockSpec((None, 1, n), lambda bi, ii: (bi, 0, 0)),
            pl.BlockSpec((1, d_edge), lambda bi, ii: (0, 0)),
            pl.BlockSpec((1, d_edge), lambda bi, ii: (0, 0)),
            pl.BlockSpec((1, 1), lambda bi, ii: (0, 0)),
            pl.BlockSpec((d_edge, d6), lambda bi, ii: (0, 0)),
            pl.BlockSpec((1, d6), lambda bi, ii: (0, 0)),
        ],
        out_specs=pl.BlockSpec((None, tile_i, d6), lambda bi, ii: (bi, ii, 0)),
        compiler_params=pltpu.CompilerParams(
            dimension_semantics=dim_sem,
            vmem_limit_bytes=vmem_limit),
        cost_estimate=pl.CostEstimate(flops=flops,
                                      transcendentals=transcendentals,
                                      bytes_accessed=bytes_accessed),
    )(edge_feats, dg, s_out, v_in, v_edge, c, wl, bl.reshape(1, d6))

    # torch .chunk(6, dim=-1)
    return tuple(jnp.split(out, 6, axis=-1))


# ----------------------------------------------------------------------------
# Parameters (deterministic, synthetic; weights stored as [din, dout], f32)
# ----------------------------------------------------------------------------
def _linear_params(key, din, dout):
    kw, kb = jax.random.split(key)
    w = jax.random.normal(kw, (din, dout), jnp.float32) / jnp.sqrt(jnp.float32(din))
    b = 0.02 * jax.random.normal(kb, (dout,), jnp.float32)
    return w, b


def init_adaln_params(key, d_edge, d_model=None):
    d_model = d_edge if d_model is None else d_model
    ks = jax.random.split(key, 5)
    return {
        "w_in": _linear_params(ks[0], d_edge, d_edge),
        "w_out": _linear_params(ks[1], d_edge, d_edge),
        "w_edge": _linear_params(ks[2], d_edge, d_edge),
        "a": _linear_params(ks[3], 3 * d_edge, 1),
        "linear": _linear_params(ks[4], d_edge, 6 * d_model),
    }


# ----------------------------------------------------------------------------
# Pure-JAX reference (mirrors the PyTorch forward literally) for verification
# ----------------------------------------------------------------------------
def adaln_reference(params, edge_feats):
    hp = jax.lax.Precision.HIGHEST
    edge_feats = edge_feats.astype(jnp.float32)     # bf16 -> f32 is exact
    b, n, _, d_edge = edge_feats.shape
    w_in_w, w_in_b = params["w_in"]
    w_out_w, w_out_b = params["w_out"]
    w_edge_w, w_edge_b = params["w_edge"]
    a_w, a_b = params["a"]
    l_w, l_b = params["linear"]

    aggr = jnp.swapaxes(jnp.diagonal(edge_feats, axis1=1, axis2=2), -1, -2)   # [B,N,de]
    w_in = jnp.einsum("bnd,de->bne", aggr, w_in_w, precision=hp) + w_in_b
    w_in = jnp.broadcast_to(w_in[:, :, None, :], (b, n, n, d_edge))
    w_out = jnp.einsum("bnd,de->bne", aggr, w_out_w, precision=hp) + w_out_b
    w_out = jnp.broadcast_to(w_out[:, None, :, :], (b, n, n, d_edge))
    w_edge = jnp.einsum("bijd,de->bije", edge_feats, w_edge_w, precision=hp) + w_edge_b
    cat = jnp.concatenate([w_in, w_out, w_edge], axis=-1)
    attn = jax.nn.silu(jnp.einsum("bijk,kl->bijl", cat, a_w, precision=hp) + a_b)
    weight = jax.nn.softmax(attn, axis=2)
    aggr = aggr + jnp.sum(edge_feats * weight, axis=2)
    messages = jax.nn.silu(aggr)
    out = jnp.einsum("bnd,dk->bnk", messages, l_w, precision=hp) + l_b
    return tuple(jnp.split(out, 6, axis=-1))


# ----------------------------------------------------------------------------
# Main
# ----------------------------------------------------------------------------
if __name__ == "__main__":
    B, N, D_EDGE = 2, 8, 64
    D_MODEL = D_EDGE  # AdaLN default (d_model=None -> d_edge)

    key = jax.random.PRNGKey(0)
    k_par, k_e = jax.random.split(key)
    params = init_adaln_params(k_par, D_EDGE)
    # The producer hands the kernel bf16 activations directly (halves HBM
    # traffic on the dominant [B,N,N,d_edge] slab); no f32->bf16 cast happens
    # inside the wrapper.
    edge_feats = jax.random.normal(
        k_e, (B, N, N, D_EDGE), jnp.float32).astype(jnp.bfloat16)

    try:
        outs = jax.block_until_ready(adaln_forward(params, edge_feats))
    except Exception:
        # CORE_PARALLEL unsupported on this chip / build: fall back to the
        # plain grid semantics (identical results, single-core scheduling).
        outs = jax.block_until_ready(
            adaln_forward(params, edge_feats, core_parallel=False))

    assert len(outs) == 6
    for o in outs:
        assert o.shape == (B, N, D_MODEL)
        assert bool(jnp.all(jnp.isfinite(o)))

    # verify against the literal (unfused) reference
    refs = adaln_reference(params, edge_feats)
    for o, r in zip(outs, refs):
        err = float(jnp.max(jnp.abs(o - r)))
        assert bool(jnp.allclose(o, r, rtol=2e-2, atol=2e-2)), err

    print("KERNEL_OK")
</pallas_src>

<mosaic_0001>
module attributes {stable_mosaic.version = 11 : i64} {
  func.func @_adaln_kernel(%arg0: i32, %arg1: i32, %arg2: memref<1x8x8x64xbf16, #tpu.memory_space<vmem>>, %arg3: memref<1x8x64xbf16, #tpu.memory_space<vmem>>, %arg4: memref<1x1x8xf32, #tpu.memory_space<vmem>>, %arg5: memref<1x64xf32, #tpu.memory_space<vmem>>, %arg6: memref<1x64xf32, #tpu.memory_space<vmem>>, %arg7: memref<1x1xf32, #tpu.memory_space<vmem>>, %arg8: memref<64x384xf32, #tpu.memory_space<vmem>>, %arg9: memref<1x384xf32, #tpu.memory_space<vmem>>, %arg10: memref<1x8x384xf32, #tpu.memory_space<vmem>>) attributes {dimension_semantics = [#tpu.dimension_semantics<parallel>, #tpu.dimension_semantics<parallel>], iteration_bounds = array<i64: 2, 1>, scalar_prefetch = 0 : i64, scratch_operands = 0 : i64, tpu.core_type = #tpu.core_type<tc>, window_params = [{transform_indices = @transform_0, window_bounds = array<i64: 1, 8, 8, 64>}, {transform_indices = @transform_1, window_bounds = array<i64: 1, 8, 64>}, {transform_indices = @transform_2, window_bounds = array<i64: 1, 1, 8>}, {pipeline_mode = #tpu.pipeline_mode<synchronous>, transform_indices = @transform_3, window_bounds = array<i64: 1, 64>}, {pipeline_mode = #tpu.pipeline_mode<synchronous>, transform_indices = @transform_4, window_bounds = array<i64: 1, 64>}, {pipeline_mode = #tpu.pipeline_mode<synchronous>, transform_indices = @transform_5, window_bounds = array<i64: 1, 1>}, {pipeline_mode = #tpu.pipeline_mode<synchronous>, transform_indices = @transform_6, window_bounds = array<i64: 64, 384>}, {pipeline_mode = #tpu.pipeline_mode<synchronous>, transform_indices = @transform_7, window_bounds = array<i64: 1, 384>}, {transform_indices = @transform_8, window_bounds = array<i64: 1, 8, 384>}]} {
    %c0 = arith.constant 0 : index
    %c0_0 = arith.constant 0 : index
    %c0_1 = arith.constant 0 : index
    %0 = vector.load %arg3[%c0, %c0_0, %c0_1] : memref<1x8x64xbf16, #tpu.memory_space<vmem>>, vector<1x8x64xbf16>
    %1 = vector.shape_cast %0 : vector<1x8x64xbf16> to vector<8x64xbf16>
    %2 = arith.extf %1 : vector<8x64xbf16> to vector<8x64xf32>
    %c0_2 = arith.constant 0 : index
    %c0_3 = arith.constant 0 : index
    %3 = vector.load %arg5[%c0_2, %c0_3] : memref<1x64xf32, #tpu.memory_space<vmem>>, vector<1x64xf32>
    %4 = vector.broadcast %3 : vector<1x64xf32> to vector<8x64xf32>
    %5 = arith.mulf %2, %4 : vector<8x64xf32>
    %cst = arith.constant dense<0.000000e+00> : vector<8xf32>
    %6 = vector.multi_reduction <add>, %5, %cst [1] : vector<8x64xf32> to vector<8xf32>
    %7 = vector.shape_cast %6 : vector<8xf32> to vector<8x1xf32>
    %c0_4 = arith.constant 0 : index
    %c0_5 = arith.constant 0 : index
    %c0_6 = arith.constant 0 : index
    %c0_7 = arith.constant 0 : index
    %8 = vector.load %arg2[%c0_4, %c0_5, %c0_6, %c0_7] : memref<1x8x8x64xbf16, #tpu.memory_space<vmem>>, vector<1x8x8x64xbf16>
    %9 = vector.shape_cast %8 : vector<1x8x8x64xbf16> to vector<8x8x64xbf16>
    %c0_8 = arith.constant 0 : index
    %c0_9 = arith.constant 0 : index
    %10 = vector.load %arg6[%c0_8, %c0_9] : memref<1x64xf32, #tpu.memory_space<vmem>>, vector<1x64xf32>
    %11 = vector.shape_cast %10 : vector<1x64xf32> to vector<1x1x64xf32>
    %12 = arith.extf %9 : vector<8x8x64xbf16> to vector<8x8x64xf32>
    %13 = vector.broadcast %11 : vector<1x1x64xf32> to vector<8x8x64xf32>
    %14 = arith.mulf %12, %13 : vector<8x8x64xf32>
    %cst_10 = arith.constant dense<0.000000e+00> : vector<8x8xf32>
    %15 = vector.multi_reduction <add>, %14, %cst_10 [2] : vector<8x8x64xf32> to vector<8x8xf32>
    %16 = vector.broadcast %7 : vector<8x1xf32> to vector<8x8xf32>
    %17 = arith.addf %15, %16 : vector<8x8xf32>
    %c0_11 = arith.constant 0 : index
    %c0_12 = arith.constant 0 : index
    %c0_13 = arith.constant 0 : index
    %18 = vector.load %arg4[%c0_11, %c0_12, %c0_13] : memref<1x1x8xf32, #tpu.memory_space<vmem>>, vector<1x1x8xf32>
    %19 = vector.shape_cast %18 : vector<1x1x8xf32> to vector<1x8xf32>
    %20 = vector.broadcast %19 : vector<1x8xf32> to vector<8x8xf32>
    %21 = arith.addf %17, %20 : vector<8x8xf32>
    %c0_14 = arith.constant 0 : index
    %c0_15 = arith.constant 0 : index
    %22 = vector.load %arg7[%c0_14, %c0_15] : memref<1x1xf32, #tpu.memory_space<vmem>>, vector<1x1xf32>
    %23 = vector.broadcast %22 : vector<1x1xf32> to vector<8x8xf32>
    %24 = arith.addf %21, %23 : vector<8x8xf32>
    %25 = arith.negf %24 : vector<8x8xf32>
    %26 = math.exp %25 : vector<8x8xf32>
    %cst_16 = arith.constant 1.000000e+00 : f32
    %27 = vector.broadcast %cst_16 : f32 to vector<8x8xf32>
    %28 = arith.addf %27, %26 : vector<8x8xf32>
    %29 = arith.divf %27, %28 : vector<8x8xf32>
    %30 = arith.mulf %24, %29 : vector<8x8xf32>
    %cst_17 = arith.constant dense<0xFF800000> : vector<8xf32>
    %31 = vector.multi_reduction <maximumf>, %30, %cst_17 [1] : vector<8x8xf32> to vector<8xf32>
    %32 = vector.shape_cast %31 : vector<8xf32> to vector<8x1xf32>
    %33 = vector.broadcast %32 : vector<8x1xf32> to vector<8x8xf32>
    %34 = arith.subf %30, %33 : vector<8x8xf32>
    %35 = math.exp %34 : vector<8x8xf32>
    %cst_18 = arith.constant dense<0.000000e+00> : vector<8xf32>
    %36 = vector.multi_reduction <add>, %35, %cst_18 [1] : vector<8x8xf32> to vector<8xf32>
    %37 = vector.shape_cast %36 : vector<8xf32> to vector<8x1xf32>
    %38 = vector.broadcast %37 : vector<8x1xf32> to vector<8x8xf32>
    %39 = arith.divf %35, %38 : vector<8x8xf32>
    %c0_19 = arith.constant 0 : index
    %c0_20 = arith.constant 0 : index
    %c0_21 = arith.constant 0 : index
    %c0_22 = arith.constant 0 : index
    %40 = vector.load %arg2[%c0_19, %c0_20, %c0_21, %c0_22] : memref<1x8x8x64xbf16, #tpu.memory_space<vmem>>, vector<1x8x8x64xbf16>
    %41 = vector.shape_cast %40 : vector<1x8x8x64xbf16> to vector<8x8x64xbf16>
    %42 = vector.shape_cast %39 : vector<8x8xf32> to vector<8x8x1xf32>
    %43 = arith.extf %41 : vector<8x8x64xbf16> to vector<8x8x64xf32>
    %44 = vector.broadcast %42 : vector<8x8x1xf32> to vector<8x8x64xf32>
    %45 = arith.mulf %43, %44 : vector<8x8x64xf32>
    %cst_23 = arith.constant dense<0.000000e+00> : vector<8x64xf32>
    %46 = vector.multi_reduction <add>, %45, %cst_23 [1] : vector<8x8x64xf32> to vector<8x64xf32>
    %47 = arith.addf %2, %46 : vector<8x64xf32>
    %48 = arith.negf %47 : vector<8x64xf32>
    %49 = math.exp %48 : vector<8x64xf32>
    %cst_24 = arith.constant 1.000000e+00 : f32
    %50 = vector.broadcast %cst_24 : f32 to vector<8x64xf32>
    %51 = arith.addf %50, %49 : vector<8x64xf32>
    %52 = arith.divf %50, %51 : vector<8x64xf32>
    %53 = arith.mulf %47, %52 : vector<8x64xf32>
    %c0_25 = arith.constant 0 : index
    %c0_26 = arith.constant 0 : index
    %54 = vector.load %arg8[%c0_25, %c0_26] : memref<64x384xf32, #tpu.memory_space<vmem>>, vector<64x384xf32>
    %cst_27 = arith.constant dense<0.000000e+00> : vector<8x384xf32>
    %55 = tpu.matmul %53, %54, %cst_27 {dimension_numbers = #tpu.dot_dimension_numbers<[1], [0], [0], [1], [0, 0, 1, 1], [], []>} : vector<8x64xf32>, vector<64x384xf32>, vector<8x384xf32> -> vector<8x384xf32>
    %c0_28 = arith.constant 0 : index
    %c0_29 = arith.constant 0 : index
    %56 = vector.load %arg9[%c0_28, %c0_29] : memref<1x384xf32, #tpu.memory_space<vmem>>, vector<1x384xf32>
    %57 = vector.broadcast %56 : vector<1x384xf32> to vector<8x384xf32>
    %58 = arith.addf %55, %57 : vector<8x384xf32>
    %c0_30 = arith.constant 0 : index
    %c0_31 = arith.constant 0 : index
    %c0_32 = arith.constant 0 : index
    %59 = vector.load %arg10[%c0_30, %c0_31, %c0_32] : memref<1x8x384xf32, #tpu.memory_space<vmem>>, vector<1x8x384xf32>
    %60 = vector.shape_cast %59 : vector<1x8x384xf32> to vector<8x384xf32>
    %61 = vector.shape_cast %58 : vector<8x384xf32> to vector<1x8x384xf32>
    tpu.vector_store %arg10[%c0_30, %c0_31, %c0_32], %61 {strides = array<i32>} : memref<1x8x384xf32, #tpu.memory_space<vmem>>, vector<1x8x384xf32>,
    return
  }
  func.func @transform_0(%arg0: i32, %arg1: i32) -> (i32, i32, i32, i32) {
    %c0_i32 = arith.constant 0 : i32
    %c0_i32_0 = arith.constant 0 : i32
    %c0_i32_1 = arith.constant 0 : i32
    return %arg0, %arg1, %c0_i32, %c0_i32_0 : i32, i32, i32, i32
  }
  func.func @transform_1(%arg0: i32, %arg1: i32) -> (i32, i32, i32) {
    %c0_i32 = arith.constant 0 : i32
    %c0_i32_0 = arith.constant 0 : i32
    return %arg0, %arg1, %c0_i32 : i32, i32, i32
  }
  func.func @transform_2(%arg0: i32, %arg1: i32) -> (i32, i32, i32) {
    %c0_i32 = arith.constant 0 : i32
    %c0_i32_0 = arith.constant 0 : i32
    %c0_i32_1 = arith.constant 0 : i32
    return %arg0, %c0_i32, %c0_i32_0 : i32, i32, i32
  }
  func.func @transform_3(%arg0: i32, %arg1: i32) -> (i32, i32) {
    %c0_i32 = arith.constant 0 : i32
    %c0_i32_0 = arith.constant 0 : i32
    %c0_i32_1 = arith.constant 0 : i32
    return %c0_i32, %c0_i32_0 : i32, i32
  }
  func.func @transform_4(%arg0: i32, %arg1: i32) -> (i32, i32) {
    %c0_i32 = arith.constant 0 : i32
    %c0_i32_0 = arith.constant 0 : i32
    %c0_i32_1 = arith.constant 0 : i32
    return %c0_i32, %c0_i32_0 : i32, i32
  }
  func.func @transform_5(%arg0: i32, %arg1: i32) -> (i32, i32) {
    %c0_i32 = arith.constant 0 : i32
    %c0_i32_0 = arith.constant 0 : i32
    %c0_i32_1 = arith.constant 0 : i32
    return %c0_i32, %c0_i32_0 : i32, i32
  }
  func.func @transform_6(%arg0: i32, %arg1: i32) -> (i32, i32) {
    %c0_i32 = arith.constant 0 : i32
    %c0_i32_0 = arith.constant 0 : i32
    %c0_i32_1 = arith.constant 0 : i32
    return %c0_i32, %c0_i32_0 : i32, i32
  }
  func.func @transform_7(%arg0: i32, %arg1: i32) -> (i32, i32) {
    %c0_i32 = arith.constant 0 : i32
    %c0_i32_0 = arith.constant 0 : i32
    %c0_i32_1 = arith.constant 0 : i32
    return %c0_i32, %c0_i32_0 : i32, i32
  }
  func.func @transform_8(%arg0: i32, %arg1: i32) -> (i32, i32, i32) {
    %c0_i32 = arith.constant 0 : i32
    %c0_i32_0 = arith.constant 0 : i32
    return %arg0, %arg1, %c0_i32 : i32, i32, i32
  }
}

module attributes {stable_mosaic.version = 11 : i64} {
  func.func @_adaln_kernel(%arg0: i32, %arg1: i32, %arg2: memref<1x8x8x64xbf16, #tpu.memory_space<vmem>>, %arg3: memref<1x8x64xbf16, #tpu.memory_space<vmem>>, %arg4: memref<1x1x8xf32, #tpu.memory_space<vmem>>, %arg5: memref<1x64xf32, #tpu.memory_space<vmem>>, %arg6: memref<1x64xf32, #tpu.memory_space<vmem>>, %arg7: memref<1x1xf32, #tpu.memory_space<vmem>>, %arg8: memref<64x384xf32, #tpu.memory_space<vmem>>, %arg9: memref<1x384xf32, #tpu.memory_space<vmem>>, %arg10: memref<1x8x384xf32, #tpu.memory_space<vmem>>) attributes {dimension_semantics = [#tpu.dimension_semantics<parallel>, #tpu.dimension_semantics<parallel>], iteration_bounds = array<i64: 2, 1>, scalar_prefetch = 0 : i64, scratch_operands = 0 : i64, tpu.core_type = #tpu.core_type<tc>, window_params = [{transform_indices = @transform_0, window_bounds = array<i64: 1, 8, 8, 64>}, {transform_indices = @transform_1, window_bounds = array<i64: 1, 8, 64>}, {transform_indices = @transform_2, window_bounds = array<i64: 1, 1, 8>}, {pipeline_mode = #tpu.pipeline_mode<synchronous>, transform_indices = @transform_3, window_bounds = array<i64: 1, 64>}, {pipeline_mode = #tpu.pipeline_mode<synchronous>, transform_indices = @transform_4, window_bounds = array<i64: 1, 64>}, {pipeline_mode = #tpu.pipeline_mode<synchronous>, transform_indices = @transform_5, window_bounds = array<i64: 1, 1>}, {pipeline_mode = #tpu.pipeline_mode<synchronous>, transform_indices = @transform_6, window_bounds = array<i64: 64, 384>}, {pipeline_mode = #tpu.pipeline_mode<synchronous>, transform_indices = @transform_7, window_bounds = array<i64: 1, 384>}, {transform_indices = @transform_8, window_bounds = array<i64: 1, 8, 384>}]} {
    %c0 = arith.constant 0 : index
    %c0_0 = arith.constant 0 : index
    %c0_1 = arith.constant 0 : index
    %0 = vector.load %arg3[%c0, %c0_0, %c0_1] : memref<1x8x64xbf16, #tpu.memory_space<vmem>>, vector<1x8x64xbf16>
    %1 = vector.shape_cast %0 : vector<1x8x64xbf16> to vector<8x64xbf16>
    %2 = arith.extf %1 : vector<8x64xbf16> to vector<8x64xf32>
    %c0_2 = arith.constant 0 : index
    %c0_3 = arith.constant 0 : index
    %3 = vector.load %arg5[%c0_2, %c0_3] : memref<1x64xf32, #tpu.memory_space<vmem>>, vector<1x64xf32>
    %4 = vector.broadcast %3 : vector<1x64xf32> to vector<8x64xf32>
    %5 = arith.mulf %2, %4 : vector<8x64xf32>
    %cst = arith.constant dense<0.000000e+00> : vector<8xf32>
    %6 = vector.multi_reduction <add>, %5, %cst [1] : vector<8x64xf32> to vector<8xf32>
    %7 = vector.shape_cast %6 : vector<8xf32> to vector<8x1xf32>
    %c0_4 = arith.constant 0 : index
    %c0_5 = arith.constant 0 : index
    %c0_6 = arith.constant 0 : index
    %c0_7 = arith.constant 0 : index
    %8 = vector.load %arg2[%c0_4, %c0_5, %c0_6, %c0_7] : memref<1x8x8x64xbf16, #tpu.memory_space<vmem>>, vector<1x8x8x64xbf16>
    %9 = vector.shape_cast %8 : vector<1x8x8x64xbf16> to vector<8x8x64xbf16>
    %c0_8 = arith.constant 0 : index
    %c0_9 = arith.constant 0 : index
    %10 = vector.load %arg6[%c0_8, %c0_9] : memref<1x64xf32, #tpu.memory_space<vmem>>, vector<1x64xf32>
    %11 = vector.shape_cast %10 : vector<1x64xf32> to vector<1x1x64xf32>
    %12 = arith.extf %9 : vector<8x8x64xbf16> to vector<8x8x64xf32>
    %13 = vector.broadcast %11 : vector<1x1x64xf32> to vector<8x8x64xf32>
    %14 = arith.mulf %12, %13 : vector<8x8x64xf32>
    %cst_10 = arith.constant dense<0.000000e+00> : vector<8x8xf32>
    %15 = vector.multi_reduction <add>, %14, %cst_10 [2] : vector<8x8x64xf32> to vector<8x8xf32>
    %16 = vector.broadcast %7 : vector<8x1xf32> to vector<8x8xf32>
    %17 = arith.addf %15, %16 : vector<8x8xf32>
    %c0_11 = arith.constant 0 : index
    %c0_12 = arith.constant 0 : index
    %c0_13 = arith.constant 0 : index
    %18 = vector.load %arg4[%c0_11, %c0_12, %c0_13] : memref<1x1x8xf32, #tpu.memory_space<vmem>>, vector<1x1x8xf32>
    %19 = vector.shape_cast %18 : vector<1x1x8xf32> to vector<1x8xf32>
    %20 = vector.broadcast %19 : vector<1x8xf32> to vector<8x8xf32>
    %21 = arith.addf %17, %20 : vector<8x8xf32>
    %c0_14 = arith.constant 0 : index
    %c0_15 = arith.constant 0 : index
    %22 = vector.load %arg7[%c0_14, %c0_15] : memref<1x1xf32, #tpu.memory_space<vmem>>, vector<1x1xf32>
    %23 = vector.broadcast %22 : vector<1x1xf32> to vector<8x8xf32>
    %24 = arith.addf %21, %23 : vector<8x8xf32>
    %25 = arith.negf %24 : vector<8x8xf32>
    %26 = math.exp %25 : vector<8x8xf32>
    %cst_16 = arith.constant 1.000000e+00 : f32
    %27 = vector.broadcast %cst_16 : f32 to vector<8x8xf32>
    %28 = arith.addf %27, %26 : vector<8x8xf32>
    %29 = arith.divf %27, %28 : vector<8x8xf32>
    %30 = arith.mulf %24, %29 : vector<8x8xf32>
    %cst_17 = arith.constant dense<0xFF800000> : vector<8xf32>
    %31 = vector.multi_reduction <maximumf>, %30, %cst_17 [1] : vector<8x8xf32> to vector<8xf32>
    %32 = vector.shape_cast %31 : vector<8xf32> to vector<8x1xf32>
    %33 = vector.broadcast %32 : vector<8x1xf32> to vector<8x8xf32>
    %34 = arith.subf %30, %33 : vector<8x8xf32>
    %35 = math.exp %34 : vector<8x8xf32>
    %cst_18 = arith.constant dense<0.000000e+00> : vector<8xf32>
    %36 = vector.multi_reduction <add>, %35, %cst_18 [1] : vector<8x8xf32> to vector<8xf32>
    %37 = vector.shape_cast %36 : vector<8xf32> to vector<8x1xf32>
    %38 = vector.broadcast %37 : vector<8x1xf32> to vector<8x8xf32>
    %39 = arith.divf %35, %38 : vector<8x8xf32>
    %c0_19 = arith.constant 0 : index
    %c0_20 = arith.constant 0 : index
    %c0_21 = arith.constant 0 : index
    %c0_22 = arith.constant 0 : index
    %40 = vector.load %arg2[%c0_19, %c0_20, %c0_21, %c0_22] : memref<1x8x8x64xbf16, #tpu.memory_space<vmem>>, vector<1x8x8x64xbf16>
    %41 = vector.shape_cast %40 : vector<1x8x8x64xbf16> to vector<8x8x64xbf16>
    %42 = vector.shape_cast %39 : vector<8x8xf32> to vector<8x8x1xf32>
    %43 = arith.extf %41 : vector<8x8x64xbf16> to vector<8x8x64xf32>
    %44 = vector.broadcast %42 : vector<8x8x1xf32> to vector<8x8x64xf32>
    %45 = arith.mulf %43, %44 : vector<8x8x64xf32>
    %cst_23 = arith.constant dense<0.000000e+00> : vector<8x64xf32>
    %46 = vector.multi_reduction <add>, %45, %cst_23 [1] : vector<8x8x64xf32> to vector<8x64xf32>
    %47 = arith.addf %2, %46 : vector<8x64xf32>
    %48 = arith.negf %47 : vector<8x64xf32>
    %49 = math.exp %48 : vector<8x64xf32>
    %cst_24 = arith.constant 1.000000e+00 : f32
    %50 = vector.broadcast %cst_24 : f32 to vector<8x64xf32>
    %51 = arith.addf %50, %49 : vector<8x64xf32>
    %52 = arith.divf %50, %51 : vector<8x64xf32>
    %53 = arith.mulf %47, %52 : vector<8x64xf32>
    %c0_25 = arith.constant 0 : index
    %c0_26 = arith.constant 0 : index
    %54 = vector.load %arg8[%c0_25, %c0_26] : memref<64x384xf32, #tpu.memory_space<vmem>>, vector<64x384xf32>
    %cst_27 = arith.constant dense<0.000000e+00> : vector<8x384xf32>
    %55 = tpu.matmul %53, %54, %cst_27 {dimension_numbers = #tpu.dot_dimension_numbers<[1], [0], [0], [1], [0, 0, 1, 1], [], []>} : vector<8x64xf32>, vector<64x384xf32>, vector<8x384xf32> -> vector<8x384xf32>
    %c0_28 = arith.constant 0 : index
    %c0_29 = arith.constant 0 : index
    %56 = vector.load %arg9[%c0_28, %c0_29] : memref<1x384xf32, #tpu.memory_space<vmem>>, vector<1x384xf32>
    %57 = vector.broadcast %56 : vector<1x384xf32> to vector<8x384xf32>
    %58 = arith.addf %55, %57 : vector<8x384xf32>
    %c0_30 = arith.constant 0 : index
    %c0_31 = arith.constant 0 : index
    %c0_32 = arith.constant 0 : index
    %59 = vector.load %arg10[%c0_30, %c0_31, %c0_32] : memref<1x8x384xf32, #tpu.memory_space<vmem>>, vector<1x8x384xf32>
    %60 = vector.shape_cast %59 : vector<1x8x384xf32> to vector<8x384xf32>
    %61 = vector.shape_cast %58 : vector<8x384xf32> to vector<1x8x384xf32>
    tpu.vector_store %arg10[%c0_30, %c0_31, %c0_32], %61 {strides = array<i32>} : memref<1x8x384xf32, #tpu.memory_space<vmem>>, vector<1x8x384xf32>,
    return
  }
  func.func @transform_0(%arg0: i32, %arg1: i32) -> (i32, i32, i32, i32) {
    %c0_i32 = arith.constant 0 : i32
    %c0_i32_0 = arith.constant 0 : i32
    %c0_i32_1 = arith.constant 0 : i32
    return %arg0, %arg1, %c0_i32, %c0_i32_0 : i32, i32, i32, i32
  }
  func.func @transform_1(%arg0: i32, %arg1: i32) -> (i32, i32, i32) {
    %c0_i32 = arith.constant 0 : i32
    %c0_i32_0 = arith.constant 0 : i32
    return %arg0, %arg1, %c0_i32 : i32, i32, i32
  }
  func.func @transform_2(%arg0: i32, %arg1: i32) -> (i32, i32, i32) {
    %c0_i32 = arith.constant 0 : i32
    %c0_i32_0 = arith.constant 0 : i32
    %c0_i32_1 = arith.constant 0 : i32
    return %arg0, %c0_i32, %c0_i32_0 : i32, i32, i32
  }
  func.func @transform_3(%arg0: i32, %arg1: i32) -> (i32, i32) {
    %c0_i32 = arith.constant 0 : i32
    %c0_i32_0 = arith.constant 0 : i32
    %c0_i32_1 = arith.constant 0 : i32
    return %c0_i32, %c0_i32_0 : i32, i32
  }
  func.func @transform_4(%arg0: i32, %arg1: i32) -> (i32, i32) {
    %c0_i32 = arith.constant 0 : i32
    %c0_i32_0 = arith.constant 0 : i32
    %c0_i32_1 = arith.constant 0 : i32
    return %c0_i32, %c0_i32_0 : i32, i32
  }
  func.func @transform_5(%arg0: i32, %arg1: i32) -> (i32, i32) {
    %c0_i32 = arith.constant 0 : i32
    %c0_i32_0 = arith.constant 0 : i32
    %c0_i32_1 = arith.constant 0 : i32
    return %c0_i32, %c0_i32_0 : i32, i32
  }
  func.func @transform_6(%arg0: i32, %arg1: i32) -> (i32, i32) {
    %c0_i32 = arith.constant 0 : i32
    %c0_i32_0 = arith.constant 0 : i32
    %c0_i32_1 = arith.constant 0 : i32
    return %c0_i32, %c0_i32_0 : i32, i32
  }
  func.func @transform_7(%arg0: i32, %arg1: i32) -> (i32, i32) {
    %c0_i32 = arith.constant 0 : i32
    %c0_i32_0 = arith.constant 0 : i32
    %c0_i32_1 = arith.constant 0 : i32
    return %c0_i32, %c0_i32_0 : i32, i32
  }
  func.func @transform_8(%arg0: i32, %arg1: i32) -> (i32, i32, i32) {
    %c0_i32 = arith.constant 0 : i32
    %c0_i32_0 = arith.constant 0 : i32
    return %arg0, %arg1, %c0_i32 : i32, i32, i32
  }
}

</mosaic_0001>

<llo_original>
// kernel: adaln_forward.1
$region0: #{adaln_forward.1}
  #allocation0 [shape = 'u32[]', space=smem, size = 0x4, offset = 0x4, fixed_abs, tag = 'smem constant byte address 0x4 - core index']
  #allocation1 [shape = 'u32[144,128]{1,0:T(1,128)}', space=vmem, size = 0x12000, scoped, tag = 'internal scratch']
  #allocation2 [shape = 'f32[1,1]{1,0:T(1,128)S(1)}', space=vmem, size = 0x200, scoped, tag = 'scoped memory for adaln_forward.1']
  %s0 = inlined_call_operand.hbm [shape: bf16[2,8,8,64], index: 0, kind: input, shape index: {}]
  %s1 = inlined_call_operand.hbm [shape: bf16[2,8,64], index: 1, kind: input, shape index: {}]
  %s2 = inlined_call_operand.hbm [shape: f32[2,1,8], index: 2, kind: input, shape index: {}]
  %s3 = inlined_call_operand.hbm [shape: f32[1,64], index: 3, kind: input, shape index: {}]
  %s4 = inlined_call_operand.hbm [shape: f32[1,64], index: 4, kind: input, shape index: {}]
  %s5 = inlined_call_operand.<no memory space> [shape: f32[1,1], index: 5, kind: input, shape index: {}]
  %s6 = inlined_call_operand.hbm [shape: f32[64,384], index: 6, kind: input, shape index: {}]
  %s7 = inlined_call_operand.hbm [shape: f32[1,384], index: 7, kind: input, shape index: {}]
  %s8 = inlined_call_operand.hbm [shape: f32[2,8,384], index: 8, kind: output, shape index: {}]
  %s9 = sld [smem:[#allocation0]]
  $region93: #{adaln_forward.1} parent=0
    _
  %s11 = ssub.s32 1, %s9
  %s12 = scalar_select 0, %s11, %s9
  %v13 = vstv %s5
  %14 = vst [vmem:[#allocation2] sm:$0x1] %v13
  $region1: #{adaln_forward.1} parent=0
    #allocation3 [shape = 'u8[32768]{0}', space=vmem, size = 0x8000, scoped, tag = 'input window, operand 0']
    #allocation4 [shape = 's32[2]{0}', space=sflag, size = 0x8, scoped, tag = 'scoped memory for adaln_forward.1']
    #allocation5 [shape = 's32[2]{0}', space=sflag, size = 0x8, scoped, tag = 'scoped memory for adaln_forward.1']
    #allocation6 [shape = 'u8[4096]{0}', space=vmem, size = 0x1000, scoped, tag = 'input window, operand 1']
    #allocation7 [shape = 's32[2]{0}', space=sflag, size = 0x8, scoped, tag = 'scoped memory for adaln_forward.1']
    #allocation8 [shape = 'u8[1024]{0}', space=vmem, size = 0x400, scoped, tag = 'input window, operand 2']
    #allocation9 [shape = 'u8[512]{0}', space=vmem, size = 0x400, scoped, tag = 'input window, operand 3, single buffered']
    #allocation10 [shape = 's32[1]{0}', space=sflag, size = 0x4, scoped, tag = 'scoped memory for adaln_forward.1']
    #allocation11 [shape = 'u8[512]{0}', space=vmem, size = 0x400, scoped, tag = 'input window, operand 4, single buffered']
    #allocation12 [shape = 'u8[98304]{0}', space=vmem, size = 0x18000, scoped, tag = 'input window, operand 6, single buffered']
    #allocation13 [shape = 's32[1]{0}', space=sflag, size = 0x4, scoped, tag = 'scoped memory for adaln_forward.1']
    #allocation14 [shape = 'u8[1536]{0}', space=vmem, size = 0x800, scoped, tag = 'input window, operand 7, single buffered']
    #allocation15 [shape = 'u8[24576]{0}', space=vmem, size = 0x6000, scoped, tag = 'output window, operand 0']
    %15 = vsyncpa [#allocation4], 0
    %s16 = scalar_lea.sflag [#allocation4], 1
    %17 = vsyncpa %s16, 0
    %18 = vsyncpa [#allocation7], 0
    %s19 = scalar_lea.sflag [#allocation7], 1
    %20 = vsyncpa %s19, 0
    %21 = vsyncpa [#allocation10], 0
    %22 = vsyncpa [#allocation13], 0
    %23 = vsyncpa [#allocation5], 0
    %s24 = scalar_lea.sflag [#allocation5], 1
    %25 = vsyncpa %s24, 0
    loop: start=0, step=1, limit=4
    $region2: #{adaln_forward.1} parent=1 // loop_pre_header
      _
    $region3: #{adaln_forward.1} parent=1 // loop_header
      %s27 = sphi 0, %s31
      %p28 = scmp.ge.s32.totalorder %s27, 4
      %s34 = sphi 0, %s46
      %s35 = sphi 0, %s42
      %s36 = sphi 0, %s34
      %s37 = sphi 0, %s35
      %s38 = sphi 0, %s36
      %s39 = sphi 0, %s37
      %s51 = sphi 0, %s53
      %s54 = sphi 0, %s51
      %s55 = sphi 0, %s54
      %s71 = sphi 0, %s55
      %s79 = sphi 0, %s81
      %s82 = sphi 0, %s79
      %s83 = sphi 0, %s82
      %s99 = sphi 0, %s83
      %s105 = sphi 0, %s107
      %s108 = sphi 0, %s105
      %s109 = sphi 0, %s108
      %s125 = sphi 0, %s109
      %s129 = sphi 0, %s129
      %s131 = sphi 0, %s129
      %s132 = sphi 0, %s131
      %s146 = sphi 0, %s132
      %s150 = sphi 0, %s150
      %s152 = sphi 0, %s150
      %s153 = sphi 0, %s152
      %s167 = sphi 0, %s153
      %s171 = sphi 0, %s171
      %s173 = sphi 0, %s171
      %s174 = sphi 0, %s173
      %s188 = sphi 0, %s174
      %s192 = sphi 0, %s192
      %s194 = sphi 0, %s192
      %s195 = sphi 0, %s194
      %s209 = sphi 0, %s195
      %s213 = sphi 0, %s213
      %s215 = sphi 0, %s213
      %s216 = sphi 0, %s215
      %s230 = sphi 0, %s216
      %s238 = sphi 0, %s240
      %s241 = sphi 0, %s238
      %s242 = sphi 0, %s241
      %s258 = sphi 0, %s242
    $region4: #{adaln_forward.1} parent=1 // loop_header_branch
      %30 = sbr.rel (%p28) target = $region8
    $region5: #{adaln_forward.1} parent=1 // loop_body
      %s32 = ssub.s32 %s27, 1
      %s33 = ssub.s32 %s27, 2
      %s40 = sadd.s32 1, %s35
      %p41 = scmp.ge.s32.totalorder %s40, 1
      %s42 = scalar_select %p41, 0, %s40
      %s43 = sadd.s32 1, %s34
      %s44 = scalar_select %p41, %s43, %s34
      %p45 = scmp.ge.s32.totalorder %s44, 2
      %s46 = scalar_select %p45, 0, %s44
      %s47 = ssub.s32 %s34, %s46
      %s48 = ssub.s32 %s35, %s42
      %s49 = sor.u32 %s47, %s48
      %p50 = scmp.eq.s32.totalorder %s49, 0
      %s52 = sadd.s32 %s51, 1
      %s53 = scalar_select %p50, %s51, %s52
      %p56 = pneg %p50
      %p57 = scmp.eq.s32.totalorder %s27, 1
      %p58 = por %p56, %p57
      %p59 = scmp.ne.s32.totalorder %s51, %s54
      %p60 = scmp.eq.s32.totalorder %s27, 0
      %p61 = por %p59, %p60
      %p62 = scmp.ne.s32.totalorder %s51, %s54
      %p63 = scmp.eq.s32.totalorder %s32, 1
      %p64 = por %p62, %p63
      %p65 = scmp.ne.s32.totalorder %s54, %s55
      %p66 = scmp.eq.s32.totalorder %s32, 0
      %p67 = por %p65, %p66
      %p68 = scmp.ne.s32.totalorder %s54, %s55
      %p69 = scmp.eq.s32.totalorder %s33, 1
      %p70 = por %p68, %p69
      %p72 = scmp.ne.s32.totalorder %s55, %s71
      %p73 = scmp.eq.s32.totalorder %s33, 0
      %p74 = por %p72, %p73
      %s75 = ssub.s32 %s34, %s46
      %s76 = ssub.s32 %s35, %s42
      %s77 = sor.u32 %s75, %s76
      %p78 = scmp.eq.s32.totalorder %s77, 0
      %s80 = sadd.s32 %s79, 1
      %s81 = scalar_select %p78, %s79, %s80
      %p84 = pneg %p78
      %p85 = scmp.eq.s32.totalorder %s27, 1
      %p86 = por %p84, %p85
      %p87 = scmp.ne.s32.totalorder %s79, %s82
      %p88 = scmp.eq.s32.totalorder %s27, 0
      %p89 = por %p87, %p88
      %p90 = scmp.ne.s32.totalorder %s79, %s82
      %p91 = scmp.eq.s32.totalorder %s32, 1
      %p92 = por %p90, %p91
      %p93 = scmp.ne.s32.totalorder %s82, %s83
      %p94 = scmp.eq.s32.totalorder %s32, 0
      %p95 = por %p93, %p94
      %p96 = scmp.ne.s32.totalorder %s82, %s83
      %p97 = scmp.eq.s32.totalorder %s33, 1
      %p98 = por %p96, %p97
      %p100 = scmp.ne.s32.totalorder %s83, %s99
      %p101 = scmp.eq.s32.totalorder %s33, 0
      %p102 = por %p100, %p101
      %s103 = ssub.s32 %s34, %s46
      %p104 = scmp.eq.s32.totalorder %s103, 0
      %s106 = sadd.s32 %s105, 1
      %s107 = scalar_select %p104, %s105, %s106
      %p110 = pneg %p104
      %p111 = scmp.eq.s32.totalorder %s27, 1
      %p112 = por %p110, %p111
      %p113 = scmp.ne.s32.totalorder %s105, %s108
      %p114 = scmp.eq.s32.totalorder %s27, 0
      %p115 = por %p113, %p114
      %p116 = scmp.ne.s32.totalorder %s105, %s108
      %p117 = scmp.eq.s32.totalorder %s32, 1
      %p118 = por %p116, %p117
      %p119 = scmp.ne.s32.totalorder %s108, %s109
      %p120 = scmp.eq.s32.totalorder %s32, 0
      %p121 = por %p119, %p120
      %p122 = scmp.ne.s32.totalorder %s108, %s109
      %p123 = scmp.eq.s32.totalorder %s33, 1
      %p124 = por %p122, %p123
      %p126 = scmp.ne.s32.totalorder %s109, %s125
      %p127 = scmp.eq.s32.totalorder %s33, 0
      %p128 = por %p126, %p127
      %s130 = sadd.s32 %s129, 1
      %p133 = scmp.eq.s32.totalorder %s27, 1
      %p134 = scmp.ne.s32.totalorder %s129, %s131
      %p135 = scmp.eq.s32.totalorder %s27, 0
      %p136 = por %p134, %p135
      %p137 = scmp.ne.s32.totalorder %s129, %s131
      %p138 = scmp.eq.s32.totalorder %s32, 1
      %p139 = por %p137, %p138
      %p140 = scmp.ne.s32.totalorder %s131, %s132
      %p141 = scmp.eq.s32.totalorder %s32, 0
      %p142 = por %p140, %p141
      %p143 = scmp.ne.s32.totalorder %s131, %s132
      %p144 = scmp.eq.s32.totalorder %s33, 1
      %p145 = por %p143, %p144
      %p147 = scmp.ne.s32.totalorder %s132, %s146
      %p148 = scmp.eq.s32.totalorder %s33, 0
      %p149 = por %p147, %p148
      %s151 = sadd.s32 %s150, 1
      %p154 = scmp.eq.s32.totalorder %s27, 1
      %p155 = scmp.ne.s32.totalorder %s150, %s152
      %p156 = scmp.eq.s32.totalorder %s27, 0
      %p157 = por %p155, %p156
      %p158 = scmp.ne.s32.totalorder %s150, %s152
      %p159 = scmp.eq.s32.totalorder %s32, 1
      %p160 = por %p158, %p159
      %p161 = scmp.ne.s32.totalorder %s152, %s153
      %p162 = scmp.eq.s32.totalorder %s32, 0
      %p163 = por %p161, %p162
      %p164 = scmp.ne.s32.totalorder %s152, %s153
      %p165 = scmp.eq.s32.totalorder %s33, 1
      %p166 = por %p164, %p165
      %p168 = scmp.ne.s32.totalorder %s153, %s167
      %p169 = scmp.eq.s32.totalorder %s33, 0
      %p170 = por %p168, %p169
      %s172 = sadd.s32 %s171, 1
      %p175 = scmp.eq.s32.totalorder %s27, 1
      %p176 = scmp.ne.s32.totalorder %s171, %s173
      %p177 = scmp.eq.s32.totalorder %s27, 0
      %p178 = por %p176, %p177
      %p179 = scmp.ne.s32.totalorder %s171, %s173
      %p180 = scmp.eq.s32.totalorder %s32, 1
      %p181 = por %p179, %p180
      %p182 = scmp.ne.s32.totalorder %s173, %s174
      %p183 = scmp.eq.s32.totalorder %s32, 0
      %p184 = por %p182, %p183
      %p185 = scmp.ne.s32.totalorder %s173, %s174
      %p186 = scmp.eq.s32.totalorder %s33, 1
      %p187 = por %p185, %p186
      %p189 = scmp.ne.s32.totalorder %s174, %s188
      %p190 = scmp.eq.s32.totalorder %s33, 0
      %p191 = por %p189, %p190
      %s193 = sadd.s32 %s192, 1
      %p196 = scmp.eq.s32.totalorder %s27, 1
      %p197 = scmp.ne.s32.totalorder %s192, %s194
      %p198 = scmp.eq.s32.totalorder %s27, 0
      %p199 = por %p197, %p198
      %p200 = scmp.ne.s32.totalorder %s192, %s194
      %p201 = scmp.eq.s32.totalorder %s32, 1
      %p202 = por %p200, %p201
      %p203 = scmp.ne.s32.totalorder %s194, %s195
      %p204 = scmp.eq.s32.totalorder %s32, 0
      %p205 = por %p203, %p204
      %p206 = scmp.ne.s32.totalorder %s194, %s195
      %p207 = scmp.eq.s32.totalorder %s33, 1
      %p208 = por %p206, %p207
      %p210 = scmp.ne.s32.totalorder %s195, %s209
      %p211 = scmp.eq.s32.totalorder %s33, 0
      %p212 = por %p210, %p211
      %s214 = sadd.s32 %s213, 1
      %p217 = scmp.eq.s32.totalorder %s27, 1
      %p218 = scmp.ne.s32.totalorder %s213, %s215
      %p219 = scmp.eq.s32.totalorder %s27, 0
      %p220 = por %p218, %p219
      %p221 = scmp.ne.s32.totalorder %s213, %s215
      %p222 = scmp.eq.s32.totalorder %s32, 1
      %p223 = por %p221, %p222
      %p224 = scmp.ne.s32.totalorder %s215, %s216
      %p225 = scmp.eq.s32.totalorder %s32, 0
      %p226 = por %p224, %p225
      %p227 = scmp.ne.s32.totalorder %s215, %s216
      %p228 = scmp.eq.s32.totalorder %s33, 1
      %p229 = por %p227, %p228
      %p231 = scmp.ne.s32.totalorder %s216, %s230
      %p232 = scmp.eq.s32.totalorder %s33, 0
      %p233 = por %p231, %p232
      %s234 = ssub.s32 %s34, %s46
      %s235 = ssub.s32 %s35, %s42
      %s236 = sor.u32 %s234, %s235
      %p237 = scmp.eq.s32.totalorder %s236, 0
      %s239 = sadd.s32 %s238, 1
      %s240 = scalar_select %p237, %s238, %s239
      %p243 = pneg %p237
      %p244 = scmp.eq.s32.totalorder %s27, 1
      %p245 = por %p243, %p244
      %p246 = scmp.ne.s32.totalorder %s238, %s241
      %p247 = scmp.eq.s32.totalorder %s27, 0
      %p248 = por %p246, %p247
      %p249 = scmp.ne.s32.totalorder %s238, %s241
      %p250 = scmp.eq.s32.totalorder %s32, 1
      %p251 = por %p249, %p250
      %p252 = scmp.ne.s32.totalorder %s241, %s242
      %p253 = scmp.eq.s32.totalorder %s32, 0
      %p254 = por %p252, %p253
      %p255 = scmp.ne.s32.totalorder %s241, %s242
      %p256 = scmp.eq.s32.totalorder %s33, 1
      %p257 = por %p255, %p256
      %p259 = scmp.ne.s32.totalorder %s242, %s258
      %p260 = scmp.eq.s32.totalorder %s33, 0
      %p261 = por %p259, %p260
      %p262 = scmp.le.s32.totalorder 1, %s27
      %p263 = scmp.lt.s32.totalorder %s27, 3
      %p264 = pnand %p262, %p263
      %p265 = pneg %p264
      // Predicated region
      $region9: #{adaln_forward.1} parent=5 // pred_check
        _
      $region10: #{adaln_forward.1} parent=5 // pred_check_branch
        %267 = sbr.rel (%p264) target = $region12
      $region11: #{adaln_forward.1} parent=5 // pred_region
        %s268 = ssub.s32 %s27, 1
        // Predicated region
        $region13: #{adaln_forward.1} parent=11 // pred_check
          %p269 = pneg %p142
        $region14: #{adaln_forward.1} parent=11 // pred_check_branch
          %271 = sbr.rel (%p269) target = $region16
        $region15: #{adaln_forward.1} parent=11 // pred_region
          %s273 = ssub.s32 16, 16
          %274 = vsyncadd [#allocation10], %s273
          %s276 = sshll.u32 [#allocation9], 4
          %s277 = int_to_ptr.vmem [resolvable:$true] %s276
          %279 = dma.hbm_to_vmem [thread:$0]  %s3, 16, %s277, [#allocation10]
        $region16: #{adaln_forward.1} parent=11 // pred_fallthru
          _
        // Predicated region
        $region17: #{adaln_forward.1} parent=11 // pred_check
          %p280 = pneg %p163
        $region18: #{adaln_forward.1} parent=11 // pred_check_branch
          %282 = sbr.rel (%p280) target = $region20
        $region19: #{adaln_forward.1} parent=11 // pred_region
          %s284 = ssub.s32 16, 16
          %285 = vsyncadd [#allocation10], %s284
          %s287 = sshll.u32 [#allocation11], 4
          %s288 = int_to_ptr.vmem [resolvable:$true] %s287
          %290 = dma.hbm_to_vmem [thread:$0]  %s4, 16, %s288, [#allocation10]
        $region20: #{adaln_forward.1} parent=11 // pred_fallthru
          _
        // Predicated region
        $region21: #{adaln_forward.1} parent=11 // pred_check
          %p291 = pneg %p184
        $region22: #{adaln_forward.1} parent=11 // pred_check_branch
          %293 = sbr.rel (%p291) target = $region24
        $region23: #{adaln_forward.1} parent=11 // pred_region
          _
        $region24: #{adaln_forward.1} parent=11 // pred_fallthru
          _
        // Predicated region
        $region25: #{adaln_forward.1} parent=11 // pred_check
          %p294 = pneg %p205
        $region26: #{adaln_forward.1} parent=11 // pred_check_branch
          %296 = sbr.rel (%p294) target = $region28
        $region27: #{adaln_forward.1} parent=11 // pred_region
          %s298 = ssub.s32 3072, 3072
          %299 = vsyncadd [#allocation13], %s298
          %s300 = sshll.u32 [#allocation12], 4
          %s301 = int_to_ptr.vmem [resolvable:$true] %s300
          %306 = dma.hbm_to_vmem [thread:$0]  %s6, 3072, %s301, [#allocation13], 384, 384, 24
        $region28: #{adaln_forward.1} parent=11 // pred_fallthru
          _
        // Predicated region
        $region29: #{adaln_forward.1} parent=11 // pred_check
          %p307 = pneg %p226
        $region30: #{adaln_forward.1} parent=11 // pred_check_branch
          %309 = sbr.rel (%p307) target = $region32
        $region31: #{adaln_forward.1} parent=11 // pred_region
          %s311 = ssub.s32 48, 48
          %312 = vsyncadd [#allocation13], %s311
          %s314 = sshll.u32 [#allocation14], 4
          %s315 = int_to_ptr.vmem [resolvable:$true] %s314
          %317 = dma.hbm_to_vmem [thread:$0]  %s7, 48, %s315, [#allocation13]
        $region32: #{adaln_forward.1} parent=11 // pred_fallthru
          _
      $region12: #{adaln_forward.1} parent=5 // pred_fallthru
        _
      %p318 = scmp.lt.s32.totalorder %s27, 2
      // Predicated region
      $region33: #{adaln_forward.1} parent=5 // pred_check
        %p319 = pneg %p318
      $region34: #{adaln_forward.1} parent=5 // pred_check_branch
        %321 = sbr.rel (%p319) target = $region36
      $region35: #{adaln_forward.1} parent=5 // pred_region
        // Predicated region
        $region37: #{adaln_forward.1} parent=35 // pred_check
          %p322 = pneg %p61
        $region38: #{adaln_forward.1} parent=35 // pred_check_branch
          %324 = sbr.rel (%p322) target = $region40
        $region39: #{adaln_forward.1} parent=35 // pred_region
          %s325 = sand.u32 %s51, 1
          %s326 = scalar_lea.sflag [#allocation4], %s325
          %s327 = sand.u32 %s51, 1
          %s328 = smul.addr %s327, 32
          %s329 = scalar_lea.vmem [#allocation3], %s328
          %s330 = smul.u32 8, %s35
          %s332 = ssub.s32 512, 512
          %333 = vsyncadd %s326, %s332
          %s334 = smul.addr %s34, 8
          %s335 = sadd.s32 %s330, %s334
          %s336 = smul.addr %s335, 64
          %s337 = scalar_lea.hbm %s0, %s336
          %s338 = sshll.u32 %s329, 4
          %s339 = int_to_ptr.vmem [resolvable:$true] %s338
          %344 = dma.hbm_to_vmem [thread:$0]  %s337, 512, %s339, %s326, 64, 64, 4
        $region40: #{adaln_forward.1} parent=35 // pred_fallthru
          _
        // Predicated region
        $region41: #{adaln_forward.1} parent=35 // pred_check
          %p345 = pneg %p89
        $region42: #{adaln_forward.1} parent=35 // pred_check_branch
          %347 = sbr.rel (%p345) target = $region44
        $region43: #{adaln_forward.1} parent=35 // pred_region
          %s348 = sand.u32 %s27, 1
          %s349 = scalar_lea.sflag [#allocation7], %s348
          %s350 = sand.u32 %s79, 1
          %s351 = smul.addr %s350, 4
          %s352 = scalar_lea.vmem [#allocation6], %s351
          %s354 = ssub.s32 64, 64
          %355 = vsyncadd %s349, %s354
          %s356 = sadd.s32 %s35, %s34
          %s357 = smul.addr %s356, 64
          %s358 = scalar_lea.hbm %s1, %s357
          %s360 = sshll.u32 %s352, 4
          %s361 = int_to_ptr.vmem [resolvable:$true] %s360
          %363 = dma.hbm_to_vmem [thread:$0]  %s358, 64, %s361, %s349
        $region44: #{adaln_forward.1} parent=35 // pred_fallthru
          _
        // Predicated region
        $region45: #{adaln_forward.1} parent=35 // pred_check
          %p364 = pneg %p115
        $region46: #{adaln_forward.1} parent=35 // pred_check_branch
          %366 = sbr.rel (%p364) target = $region48
        $region47: #{adaln_forward.1} parent=35 // pred_region
          %s367 = sand.u32 %s27, 1
          %s368 = scalar_lea.sflag [#allocation7], %s367
          %s369 = sand.u32 %s105, 1
          %s370 = scalar_lea.vmem [#allocation8], %s369
          %s372 = ssub.s32 16, 16
          %373 = vsyncadd %s368, %s372
          %s374 = smul.addr %s34, 16
          %s375 = scalar_lea.hbm %s2, %s374
          %s377 = sshll.u32 %s370, 4
          %s378 = int_to_ptr.vmem [resolvable:$true] %s377
          %380 = dma.hbm_to_vmem [thread:$0]  %s375, 16, %s378, %s368
        $region48: #{adaln_forward.1} parent=35 // pred_fallthru
          _
      $region36: #{adaln_forward.1} parent=5 // pred_fallthru
        _
      %p381 = scmp.le.s32.totalorder 1, %s27
      %p382 = scmp.lt.s32.totalorder %s27, 3
      %p383 = pnand %p381, %p382
      %p384 = pneg %p383
      // Predicated region
      $region49: #{adaln_forward.1} parent=5 // pred_check
        _
      $region50: #{adaln_forward.1} parent=5 // pred_check_branch
        %386 = sbr.rel (%p383) target = $region52
      $region51: #{adaln_forward.1} parent=5 // pred_region
        %s387 = ssub.s32 %s27, 1
        %s388 = sand.u32 %s54, 1
        %s389 = scalar_lea.sflag [#allocation4], %s388
        %s390 = sand.u32 %s54, 1
        %s391 = smul.addr %s390, 32
        %s392 = scalar_lea.vmem [#allocation3], %s391
        // Predicated region
        $region53: #{adaln_forward.1} parent=51 // pred_check
          %p393 = pneg %p67
        $region54: #{adaln_forward.1} parent=51 // pred_check_branch
          %395 = sbr.rel (%p393) target = $region56
        $region55: #{adaln_forward.1} parent=51 // pred_region
          %396 = dma.done %s389, 512
        $region56: #{adaln_forward.1} parent=51 // pred_fallthru
          _
        %s397 = sand.u32 %s32, 1
        %s398 = scalar_lea.sflag [#allocation7], %s397
        %s399 = sand.u32 %s82, 1
        %s400 = smul.addr %s399, 4
        %s401 = scalar_lea.vmem [#allocation6], %s400
        // Predicated region
        $region57: #{adaln_forward.1} parent=51 // pred_check
          %p402 = pneg %p95
        $region58: #{adaln_forward.1} parent=51 // pred_check_branch
          %404 = sbr.rel (%p402) target = $region60
        $region59: #{adaln_forward.1} parent=51 // pred_region
          %405 = dma.done %s398, 64
        $region60: #{adaln_forward.1} parent=51 // pred_fallthru
          _
        %s406 = sand.u32 %s32, 1
        %s407 = scalar_lea.sflag [#allocation7], %s406
        %s408 = sand.u32 %s108, 1
        %s409 = scalar_lea.vmem [#allocation8], %s408
        // Predicated region
        $region61: #{adaln_forward.1} parent=51 // pred_check
          %p410 = pneg %p121
        $region62: #{adaln_forward.1} parent=51 // pred_check_branch
          %412 = sbr.rel (%p410) target = $region64
        $region63: #{adaln_forward.1} parent=51 // pred_region
          %413 = dma.done %s407, 16
        $region64: #{adaln_forward.1} parent=51 // pred_fallthru
          _
        // Predicated region
        $region65: #{adaln_forward.1} parent=51 // pred_check
          %p414 = pneg %p142
        $region66: #{adaln_forward.1} parent=51 // pred_check_branch
          %416 = sbr.rel (%p414) target = $region68
        $region67: #{adaln_forward.1} parent=51 // pred_region
          %417 = dma.done [#allocation10], 16
        $region68: #{adaln_forward.1} parent=51 // pred_fallthru
          _
        // Predicated region
        $region69: #{adaln_forward.1} parent=51 // pred_check
          %p418 = pneg %p163
        $region70: #{adaln_forward.1} parent=51 // pred_check_branch
          %420 = sbr.rel (%p418) target = $region72
        $region71: #{adaln_forward.1} parent=51 // pred_region
          %421 = dma.done [#allocation10], 16
        $region72: #{adaln_forward.1} parent=51 // pred_fallthru
          _
        // Predicated region
        $region73: #{adaln_forward.1} parent=51 // pred_check
          %p422 = pneg %p205
        $region74: #{adaln_forward.1} parent=51 // pred_check_branch
          %424 = sbr.rel (%p422) target = $region76
        $region75: #{adaln_forward.1} parent=51 // pred_region
          %425 = dma.done [#allocation13], 3072
        $region76: #{adaln_forward.1} parent=51 // pred_fallthru
          _
        // Predicated region
        $region77: #{adaln_forward.1} parent=51 // pred_check
          %p426 = pneg %p226
        $region78: #{adaln_forward.1} parent=51 // pred_check_branch
          %428 = sbr.rel (%p426) target = $region80
        $region79: #{adaln_forward.1} parent=51 // pred_region
          %429 = dma.done [#allocation13], 48
        $region80: #{adaln_forward.1} parent=51 // pred_fallthru
          _
        %s430 = sand.u32 %s54, 1
        %s431 = scalar_lea.sflag [#allocation4], %s430
        %s432 = sand.u32 %s54, 1
        %s433 = smul.addr %s432, 32
        %s434 = scalar_lea.vmem [#allocation3], %s433
        %p435 = pneg %p67
        %p436 = pneg %p64
        %s437 = sand.u32 %s32, 1
        %s438 = scalar_lea.sflag [#allocation7], %s437
        %s439 = sand.u32 %s82, 1
        %s440 = smul.addr %s439, 4
        %s441 = scalar_lea.vmem [#allocation6], %s440
        %p442 = pneg %p95
        %p443 = pneg %p92
        %s444 = sand.u32 %s32, 1
        %s445 = scalar_lea.sflag [#allocation7], %s444
        %s446 = sand.u32 %s108, 1
        %s447 = scalar_lea.vmem [#allocation8], %s446
        %p448 = pneg %p121
        %p449 = pneg %p118
        %p450 = pneg %p142
        %p451 = pneg %p139
        %p452 = pneg %p163
        %p453 = pneg %p160
        %p454 = pneg %p184
        %p455 = pneg %p181
        %p456 = pneg %p205
        %p457 = pneg %p202
        %p458 = pneg %p226
        %p459 = pneg %p223
        %p460 = pneg %p254
        %p461 = pneg %p251
        %s462 = sand.u32 %s241, 1
        %s463 = scalar_lea.sflag [#allocation5], %s462
        %s464 = sand.u32 %s241, 1
        %s465 = smul.addr %s464, 24
        %s466 = scalar_lea.vmem [#allocation15], %s465
        %s467 = smul.u32 8, %s37
        %v468 = vld [vmem:[%s401] sm:$0xf]
        %v469 = vunpack.c.l.bf16 %v468
        %v470 = vld [vmem:[#allocation9] sm:$0x1]
        %v472 = vlaneseq
        %v473 = vshrl.u32 %v472, 7
        %v474 = vsub.s32 0, %v473
        %v475 = vrot.slane %v470, %v474
        %v477 = vmul.f32 %v469, %v475
        %vm478 = vcmask 523264
        %v479 = vsel %vm478, %v477, 0.0
        %480 = vadd.xlane.f32.xlu0 %v479
        %v481 = vpop.xlane.xlu0 %480
        %v482 = vld [vmem:[%s392] sm:$0xf]
        %v483 = vld [vmem:[%s392 + $0x4] sm:$0xf]
        %v484 = vld [vmem:[%s392 + $0x8] sm:$0xf]
        %v485 = vld [vmem:[%s392 + $0xc] sm:$0xf]
        %v486 = vld [vmem:[%s392 + $0x10] sm:$0xf]
        %v487 = vld [vmem:[%s392 + $0x14] sm:$0xf]
        %v488 = vld [vmem:[%s392 + $0x18] sm:$0xf]
        %v489 = vld [vmem:[%s392 + $0x1c] sm:$0xf]
        %v490 = vld [vmem:[#allocation11] sm:$0x1]
        %v491 = vunpack.c.l.bf16 %v482
        %v492 = vunpack.c.l.bf16 %v483
        %v493 = vunpack.c.l.bf16 %v484
        %v494 = vunpack.c.l.bf16 %v485
        %v495 = vunpack.c.l.bf16 %v486
        %v496 = vunpack.c.l.bf16 %v487
        %v497 = vunpack.c.l.bf16 %v488
        %v498 = vunpack.c.l.bf16 %v489
        %v500 = vlaneseq
        %v501 = vshrl.u32 %v500, 7
        %v502 = vsub.s32 0, %v501
        %v503 = vrot.slane %v490, %v502
        %v505 = vmul.f32 %v491, %v503
        %v506 = vmul.f32 %v492, %v503
        %v507 = vmul.f32 %v493, %v503
        %v508 = vmul.f32 %v494, %v503
        %v509 = vmul.f32 %v495, %v503
        %v510 = vmul.f32 %v496, %v503
        %v511 = vmul.f32 %v497, %v503
        %v512 = vmul.f32 %v498, %v503
        %v513 = vsel %vm478, %v505, 0.0
        %514 = vadd.xlane.f32.xlu0 %v513
        %v515 = vpop.xlane.xlu0 %514
        %v516 = vsel %vm478, %v506, 0.0
        %517 = vadd.xlane.f32.xlu0 %v516
        %v518 = vpop.xlane.xlu0 %517
        %v519 = vsel %vm478, %v507, 0.0
        %520 = vadd.xlane.f32.xlu0 %v519
        %v521 = vpop.xlane.xlu0 %520
        %v522 = vsel %vm478, %v508, 0.0
        %523 = vadd.xlane.f32.xlu0 %v522
        %v524 = vpop.xlane.xlu0 %523
        %v525 = vsel %vm478, %v509, 0.0
        %526 = vadd.xlane.f32.xlu0 %v525
        %v527 = vpop.xlane.xlu0 %526
        %v528 = vsel %vm478, %v510, 0.0
        %529 = vadd.xlane.f32.xlu0 %v528
        %v530 = vpop.xlane.xlu0 %529
        %v531 = vsel %vm478, %v511, 0.0
        %532 = vadd.xlane.f32.xlu0 %v531
        %v533 = vpop.xlane.xlu0 %532
        %v534 = vsel %vm478, %v512, 0.0
        %535 = vadd.xlane.f32.xlu0 %v534
        %v536 = vpop.xlane.xlu0 %535
        %v538 = vlaneseq
        %v539 = vshrl.u32 %v538, 7
        %v540 = vsub.s32 0, %v539
        %v541 = vrot.slane %v481, %v540
        %v542 = vlaneseq
        %v543 = vshrl.u32 %v542, 7
        %v544 = vsub.s32 1, %v543
        %v545 = vrot.slane %v481, %v544
        %v546 = vlaneseq
        %v547 = vshrl.u32 %v546, 7
        %v548 = vsub.s32 2, %v547
        %v549 = vrot.slane %v481, %v548
        %v550 = vlaneseq
        %v551 = vshrl.u32 %v550, 7
        %v552 = vsub.s32 3, %v551
        %v553 = vrot.slane %v481, %v552
        %v554 = vlaneseq
        %v555 = vshrl.u32 %v554, 7
        %v556 = vsub.s32 4, %v555
        %v557 = vrot.slane %v481, %v556
        %v558 = vlaneseq
        %v559 = vshrl.u32 %v558, 7
        %v560 = vsub.s32 5, %v559
        %v561 = vrot.slane %v481, %v560
        %v562 = vlaneseq
        %v563 = vshrl.u32 %v562, 7
        %v564 = vsub.s32 6, %v563
        %v565 = vrot.slane %v481, %v564
        %v566 = vlaneseq
        %v567 = vshrl.u32 %v566, 7
        %v568 = vsub.s32 7, %v567
        %v569 = vrot.slane %v481, %v568
        %v578 = vadd.f32 %v515, %v541
        %v579 = vadd.f32 %v518, %v545
        %v580 = vadd.f32 %v521, %v549
        %v581 = vadd.f32 %v524, %v553
        %v582 = vadd.f32 %v527, %v557
        %v583 = vadd.f32 %v530, %v561
        %v584 = vadd.f32 %v533, %v565
        %v585 = vadd.f32 %v536, %v569
        %v586 = vld [vmem:[%s409] sm:$0x1]
        %v588 = vlaneseq
        %v589 = vshrl.u32 %v588, 7
        %v590 = vsub.s32 0, %v589
        %v591 = vrot.slane %v586, %v590
        %593 = vbcast.lane.b32.xlu0 %v591, 256
        %v594 = vpop.permute.xlu0 %593
        %v596 = vadd.f32 %v578, %v594
        %v597 = vadd.f32 %v579, %v594
        %v598 = vadd.f32 %v580, %v594
        %v599 = vadd.f32 %v581, %v594
        %v600 = vadd.f32 %v582, %v594
        %v601 = vadd.f32 %v583, %v594
        %v602 = vadd.f32 %v584, %v594
        %v603 = vadd.f32 %v585, %v594
        %v604 = vld [vmem:[#allocation2] sm:$0x1]
        %v606 = vlaneseq
        %v607 = vshrl.u32 %v606, 7
        %v608 = vsub.s32 0, %v607
        %v609 = vrot.slane %v604, %v608
        %610 = vset.pattern.permute.xlu0 0
        %611 = vperm.xlu0 %610, %v609
        %v612 = vpop.permute.xlu0 %611
        %v614 = vadd.f32 %v596, %v612
        %v615 = vadd.f32 %v597, %v612
        %v616 = vadd.f32 %v598, %v612
        %v617 = vadd.f32 %v599, %v612
        %v618 = vadd.f32 %v600, %v612
        %v619 = vadd.f32 %v601, %v612
        %v620 = vadd.f32 %v602, %v612
        %v621 = vadd.f32 %v603, %v612
        %v622 = vxor.u32 %v614, 2147483648
        %v623 = vxor.u32 %v615, 2147483648
        %v624 = vxor.u32 %v616, 2147483648
        %v625 = vxor.u32 %v617, 2147483648
        %v626 = vxor.u32 %v618, 2147483648
        %v627 = vxor.u32 %v619, 2147483648
        %v628 = vxor.u32 %v620, 2147483648
        %v629 = vxor.u32 %v621, 2147483648
        %v630 = vmul.f32 %v622, 1.442695
        %v631 = vpow.pop %v630
        %v632 = vmul.f32 %v623, 1.442695
        %v633 = vpow.pop %v632
        %v634 = vmul.f32 %v624, 1.442695
        %v635 = vpow.pop %v634
        %v636 = vmul.f32 %v625, 1.442695
        %v637 = vpow.pop %v636
        %v638 = vmul.f32 %v626, 1.442695
        %v639 = vpow.pop %v638
        %v640 = vmul.f32 %v627, 1.442695
        %v641 = vpow.pop %v640
        %v642 = vmul.f32 %v628, 1.442695
        %v643 = vpow.pop %v642
        %v644 = vmul.f32 %v629, 1.442695
        %v645 = vpow.pop %v644
        %v646 = vadd.f32 %v631, 1.0
        %v647 = vadd.f32 %v633, 1.0
        %v648 = vadd.f32 %v635, 1.0
        %v649 = vadd.f32 %v637, 1.0
        %v650 = vadd.f32 %v639, 1.0
        %v651 = vadd.f32 %v641, 1.0
        %v652 = vadd.f32 %v643, 1.0
        %v653 = vadd.f32 %v645, 1.0
        %v654 = vrcp.pop %v646
        %v655 = vmul.f32 1.0, %v654
        %v656 = vrcp.pop %v647
        %v657 = vmul.f32 1.0, %v656
        %v658 = vrcp.pop %v648
        %v659 = vmul.f32 1.0, %v658
        %v660 = vrcp.pop %v649
        %v661 = vmul.f32 1.0, %v660
        %v662 = vrcp.pop %v650
        %v663 = vmul.f32 1.0, %v662
        %v664 = vrcp.pop %v651
        %v665 = vmul.f32 1.0, %v664
        %v666 = vrcp.pop %v652
        %v667 = vmul.f32 1.0, %v666
        %v668 = vrcp.pop %v653
        %v669 = vmul.f32 1.0, %v668
        %v670 = vmul.f32 %v614, %v655
        %v671 = vmul.f32 %v615, %v657
        %v672 = vmul.f32 %v616, %v659
        %v673 = vmul.f32 %v617, %v661
        %v674 = vmul.f32 %v618, %v663
        %v675 = vmul.f32 %v619, %v665
        %v676 = vmul.f32 %v620, %v667
        %v677 = vmul.f32 %v621, %v669
        %686 = vset.pattern.permute.xlu0 0
        %687 = vperm.xlu0 %686, %v670
        %v688 = vpop.permute.xlu0 %687
        %689 = vset.pattern.permute.xlu0 0
        %690 = vperm.xlu0 %689, %v671
        %v691 = vpop.permute.xlu0 %690
        %692 = vset.pattern.permute.xlu0 0
        %693 = vperm.xlu0 %692, %v672
        %v694 = vpop.permute.xlu0 %693
        %695 = vset.pattern.permute.xlu0 0
        %696 = vperm.xlu0 %695, %v673
        %v697 = vpop.permute.xlu0 %696
        %698 = vset.pattern.permute.xlu0 0
        %699 = vperm.xlu0 %698, %v674
        %v700 = vpop.permute.xlu0 %699
        %701 = vset.pattern.permute.xlu0 0
        %702 = vperm.xlu0 %701, %v675
        %v703 = vpop.permute.xlu0 %702
        %704 = vset.pattern.permute.xlu0 0
        %705 = vperm.xlu0 %704, %v676
        %v706 = vpop.permute.xlu0 %705
        %707 = vset.pattern.permute.xlu0 0
        %708 = vperm.xlu0 %707, %v677
        %v709 = vpop.permute.xlu0 %708
        %v710 = vlaneseq
        %v711 = vand.u32 %v710, 127
        %v712 = vlaneseq
        %v713 = vshrl.u32 %v712, 7
        %v714 = vsub.s32 %v711, %v713
        %v715 = vrot.slane %v688, %v714
        %v716 = vlaneseq
        %v717 = vshrl.u32 %v716, 7
        %v718 = vsub.s32 %v711, %v717
        %v719 = vrot.slane %v691, %v718
        %v720 = vlaneseq
        %v721 = vshrl.u32 %v720, 7
        %v722 = vsub.s32 %v711, %v721
        %v723 = vrot.slane %v694, %v722
        %v724 = vlaneseq
        %v725 = vshrl.u32 %v724, 7
        %v726 = vsub.s32 %v711, %v725
        %v727 = vrot.slane %v697, %v726
        %v728 = vlaneseq
        %v729 = vshrl.u32 %v728, 7
        %v730 = vsub.s32 %v711, %v729
        %v731 = vrot.slane %v700, %v730
        %v732 = vlaneseq
        %v733 = vshrl.u32 %v732, 7
        %v734 = vsub.s32 %v711, %v733
        %v735 = vrot.slane %v703, %v734
        %v736 = vlaneseq
        %v737 = vshrl.u32 %v736, 7
        %v738 = vsub.s32 %v711, %v737
        %v739 = vrot.slane %v706, %v738
        %v740 = vlaneseq
        %v741 = vshrl.u32 %v740, 7
        %v742 = vsub.s32 %v711, %v741
        %v743 = vrot.slane %v709, %v742
        %vm744 = vcmask 1041409
        %v745 = vsel %vm744, %v719, %v715
        %vm746 = vcmask 1042434
        %v747 = vsel %vm746, %v723, %v745
        %vm748 = vcmask 1043459
        %v749 = vsel %vm748, %v727, %v747
        %vm750 = vcmask 1044484
        %v751 = vsel %vm750, %v731, %v749
        %vm752 = vcmask 1045509
        %v753 = vsel %vm752, %v735, %v751
        %vm754 = vcmask 1046534
        %v755 = vsel %vm754, %v739, %v753
        %vm756 = vcmask 1047559
        %v757 = vsel %vm756, %v743, %v755
        %vm759 = vcmask 64512
        %v760 = vsel %vm759, %v757, -inf
        %761 = vmax.xlane.f32.xlu0 %v760
        %v762 = vpop.xlane.xlu0 %761
        %v764 = vlaneseq
        %v765 = vshrl.u32 %v764, 7
        %v766 = vsub.s32 0, %v765
        %v767 = vrot.slane %v762, %v766
        %v768 = vlaneseq
        %v769 = vshrl.u32 %v768, 7
        %v770 = vsub.s32 1, %v769
        %v771 = vrot.slane %v762, %v770
        %v772 = vlaneseq
        %v773 = vshrl.u32 %v772, 7
        %v774 = vsub.s32 2, %v773
        %v775 = vrot.slane %v762, %v774
        %v776 = vlaneseq
        %v777 = vshrl.u32 %v776, 7
        %v778 = vsub.s32 3, %v777
        %v779 = vrot.slane %v762, %v778
        %v780 = vlaneseq
        %v781 = vshrl.u32 %v780, 7
        %v782 = vsub.s32 4, %v781
        %v783 = vrot.slane %v762, %v782
        %v784 = vlaneseq
        %v785 = vshrl.u32 %v784, 7
        %v786 = vsub.s32 5, %v785
        %v787 = vrot.slane %v762, %v786
        %v788 = vlaneseq
        %v789 = vshrl.u32 %v788, 7
        %v790 = vsub.s32 6, %v789
        %v791 = vrot.slane %v762, %v790
        %v792 = vlaneseq
        %v793 = vshrl.u32 %v792, 7
        %v794 = vsub.s32 7, %v793
        %v795 = vrot.slane %v762, %v794
        %v804 = vsub.f32 %v670, %v767
        %v805 = vsub.f32 %v671, %v771
        %v806 = vsub.f32 %v672, %v775
        %v807 = vsub.f32 %v673, %v779
        %v808 = vsub.f32 %v674, %v783
        %v809 = vsub.f32 %v675, %v787
        %v810 = vsub.f32 %v676, %v791
        %v811 = vsub.f32 %v677, %v795
        %v812 = vmul.f32 %v804, 1.442695
        %v813 = vpow.pop %v812
        %v814 = vmul.f32 %v805, 1.442695
        %v815 = vpow.pop %v814
        %v816 = vmul.f32 %v806, 1.442695
        %v817 = vpow.pop %v816
        %v818 = vmul.f32 %v807, 1.442695
        %v819 = vpow.pop %v818
        %v820 = vmul.f32 %v808, 1.442695
        %v821 = vpow.pop %v820
        %v822 = vmul.f32 %v809, 1.442695
        %v823 = vpow.pop %v822
        %v824 = vmul.f32 %v810, 1.442695
        %v825 = vpow.pop %v824
        %v826 = vmul.f32 %v811, 1.442695
        %v827 = vpow.pop %v826
        %836 = vset.pattern.permute.xlu0 0
        %837 = vperm.xlu0 %836, %v813
        %v838 = vpop.permute.xlu0 %837
        %839 = vset.pattern.permute.xlu0 0
        %840 = vperm.xlu0 %839, %v815
        %v841 = vpop.permute.xlu0 %840
        %842 = vset.pattern.permute.xlu0 0
        %843 = vperm.xlu0 %842, %v817
        %v844 = vpop.permute.xlu0 %843
        %845 = vset.pattern.permute.xlu0 0
        %846 = vperm.xlu0 %845, %v819
        %v847 = vpop.permute.xlu0 %846
        %848 = vset.pattern.permute.xlu0 0
        %849 = vperm.xlu0 %848, %v821
        %v850 = vpop.permute.xlu0 %849
        %851 = vset.pattern.permute.xlu0 0
        %852 = vperm.xlu0 %851, %v823
        %v853 = vpop.permute.xlu0 %852
        %854 = vset.pattern.permute.xlu0 0
        %855 = vperm.xlu0 %854, %v825
        %v856 = vpop.permute.xlu0 %855
        %857 = vset.pattern.permute.xlu0 0
        %858 = vperm.xlu0 %857, %v827
        %v859 = vpop.permute.xlu0 %858
        %v860 = vlaneseq
        %v861 = vshrl.u32 %v860, 7
        %v862 = vsub.s32 %v711, %v861
        %v863 = vrot.slane %v838, %v862
        %v864 = vlaneseq
        %v865 = vshrl.u32 %v864, 7
        %v866 = vsub.s32 %v711, %v865
        %v867 = vrot.slane %v841, %v866
        %v868 = vlaneseq
        %v869 = vshrl.u32 %v868, 7
        %v870 = vsub.s32 %v711, %v869
        %v871 = vrot.slane %v844, %v870
        %v872 = vlaneseq
        %v873 = vshrl.u32 %v872, 7
        %v874 = vsub.s32 %v711, %v873
        %v875 = vrot.slane %v847, %v874
        %v876 = vlaneseq
        %v877 = vshrl.u32 %v876, 7
        %v878 = vsub.s32 %v711, %v877
        %v879 = vrot.slane %v850, %v878
        %v880 = vlaneseq
        %v881 = vshrl.u32 %v880, 7
        %v882 = vsub.s32 %v711, %v881
        %v883 = vrot.slane %v853, %v882
        %v884 = vlaneseq
        %v885 = vshrl.u32 %v884, 7
        %v886 = vsub.s32 %v711, %v885
        %v887 = vrot.slane %v856, %v886
        %v888 = vlaneseq
        %v889 = vshrl.u32 %v888, 7
        %v890 = vsub.s32 %v711, %v889
        %v891 = vrot.slane %v859, %v890
        %v892 = vsel %vm744, %v867, %v863
        %v893 = vsel %vm746, %v871, %v892
        %v894 = vsel %vm748, %v875, %v893
        %v895 = vsel %vm750, %v879, %v894
        %v896 = vsel %vm752, %v883, %v895
        %v897 = vsel %vm754, %v887, %v896
        %v898 = vsel %vm756, %v891, %v897
        %v900 = vsel %vm759, %v898, 0.0
        %901 = vadd.xlane.f32.xlu0 %v900
        %v902 = vpop.xlane.xlu0 %901
        %v904 = vlaneseq
        %v905 = vshrl.u32 %v904, 7
        %v906 = vsub.s32 0, %v905
        %v907 = vrot.slane %v902, %v906
        %v908 = vlaneseq
        %v909 = vshrl.u32 %v908, 7
        %v910 = vsub.s32 1, %v909
        %v911 = vrot.slane %v902, %v910
        %v912 = vlaneseq
        %v913 = vshrl.u32 %v912, 7
        %v914 = vsub.s32 2, %v913
        %v915 = vrot.slane %v902, %v914
        %v916 = vlaneseq
        %v917 = vshrl.u32 %v916, 7
        %v918 = vsub.s32 3, %v917
        %v919 = vrot.slane %v902, %v918
        %v920 = vlaneseq
        %v921 = vshrl.u32 %v920, 7
        %v922 = vsub.s32 4, %v921
        %v923 = vrot.slane %v902, %v922
        %v924 = vlaneseq
        %v925 = vshrl.u32 %v924, 7
        %v926 = vsub.s32 5, %v925
        %v927 = vrot.slane %v902, %v926
        %v928 = vlaneseq
        %v929 = vshrl.u32 %v928, 7
        %v930 = vsub.s32 6, %v929
        %v931 = vrot.slane %v902, %v930
        %v932 = vlaneseq
        %v933 = vshrl.u32 %v932, 7
        %v934 = vsub.s32 7, %v933
        %v935 = vrot.slane %v902, %v934
        %v944 = vrcp.pop %v907
        %v945 = vmul.f32 %v813, %v944
        %v946 = vrcp.pop %v911
        %v947 = vmul.f32 %v815, %v946
        %v948 = vrcp.pop %v915
        %v949 = vmul.f32 %v817, %v948
        %v950 = vrcp.pop %v919
        %v951 = vmul.f32 %v819, %v950
        %v952 = vrcp.pop %v923
        %v953 = vmul.f32 %v821, %v952
        %v954 = vrcp.pop %v927
        %v955 = vmul.f32 %v823, %v954
        %v956 = vrcp.pop %v931
        %v957 = vmul.f32 %v825, %v956
        %v958 = vrcp.pop %v935
        %v959 = vmul.f32 %v827, %v958
        %961 = vset.pattern.permute.xlu0 0
        %962 = vperm.xlu0 %961, %v945
        %v963 = vpop.permute.xlu0 %962
        %966 = vset.pattern.permute.xlu0 0
        %967 = vperm.xlu0 %966, %v947
        %v968 = vpop.permute.xlu0 %967
        %971 = vset.pattern.permute.xlu0 0
        %972 = vperm.xlu0 %971, %v949
        %v973 = vpop.permute.xlu0 %972
        %976 = vset.pattern.permute.xlu0 0
        %977 = vperm.xlu0 %976, %v951
        %v978 = vpop.permute.xlu0 %977
        %981 = vset.pattern.permute.xlu0 0
        %982 = vperm.xlu0 %981, %v953
        %v983 = vpop.permute.xlu0 %982
        %986 = vset.pattern.permute.xlu0 0
        %987 = vperm.xlu0 %986, %v955
        %v988 = vpop.permute.xlu0 %987
        %991 = vset.pattern.permute.xlu0 0
        %992 = vperm.xlu0 %991, %v957
        %v993 = vpop.permute.xlu0 %992
        %996 = vset.pattern.permute.xlu0 0
        %997 = vperm.xlu0 %996, %v959
        %v998 = vpop.permute.xlu0 %997
        %v1000 = vmul.f32 %v491, %v963
        %v1001 = vmul.f32 %v492, %v968
        %v1002 = vmul.f32 %v493, %v973
        %v1003 = vmul.f32 %v494, %v978
        %v1004 = vmul.f32 %v495, %v983
        %v1005 = vmul.f32 %v496, %v988
        %v1006 = vmul.f32 %v497, %v993
        %v1007 = vmul.f32 %v498, %v998
        %v1008 = vsel %vm478, %v1000, 0.0
        %v1009 = vrot.slane %v1008, 4
        %v1010 = vadd.f32 %v1008, %v1009
        %v1011 = vrot.slane %v1010, 2
        %v1012 = vadd.f32 %v1010, %v1011
        %v1013 = vrot.slane %v1012, 1
        %v1014 = vadd.f32 %v1012, %v1013
        %v1015 = vsel %vm478, %v1001, 0.0
        %v1016 = vrot.slane %v1015, 4
        %v1017 = vadd.f32 %v1015, %v1016
        %v1018 = vrot.slane %v1017, 2
        %v1019 = vadd.f32 %v1017, %v1018
        %v1020 = vrot.slane %v1019, 1
        %v1021 = vadd.f32 %v1019, %v1020
        %v1022 = vsel %vm478, %v1002, 0.0
        %v1023 = vrot.slane %v1022, 4
        %v1024 = vadd.f32 %v1022, %v1023
        %v1025 = vrot.slane %v1024, 2
        %v1026 = vadd.f32 %v1024, %v1025
        %v1027 = vrot.slane %v1026, 1
        %v1028 = vadd.f32 %v1026, %v1027
        %v1029 = vsel %vm478, %v1003, 0.0
        %v1030 = vrot.slane %v1029, 4
        %v1031 = vadd.f32 %v1029, %v1030
        %v1032 = vrot.slane %v1031, 2
        %v1033 = vadd.f32 %v1031, %v1032
        %v1034 = vrot.slane %v1033, 1
        %v1035 = vadd.f32 %v1033, %v1034
        %v1036 = vsel %vm478, %v1004, 0.0
        %v1037 = vrot.slane %v1036, 4
        %v1038 = vadd.f32 %v1036, %v1037
        %v1039 = vrot.slane %v1038, 2
        %v1040 = vadd.f32 %v1038, %v1039
        %v1041 = vrot.slane %v1040, 1
        %v1042 = vadd.f32 %v1040, %v1041
        %v1043 = vsel %vm478, %v1005, 0.0
        %v1044 = vrot.slane %v1043, 4
        %v1045 = vadd.f32 %v1043, %v1044
        %v1046 = vrot.slane %v1045, 2
        %v1047 = vadd.f32 %v1045, %v1046
        %v1048 = vrot.slane %v1047, 1
        %v1049 = vadd.f32 %v1047, %v1048
        %v1050 = vsel %vm478, %v1006, 0.0
        %v1051 = vrot.slane %v1050, 4
        %v1052 = vadd.f32 %v1050, %v1051
        %v1053 = vrot.slane %v1052, 2
        %v1054 = vadd.f32 %v1052, %v1053
        %v1055 = vrot.slane %v1054, 1
        %v1056 = vadd.f32 %v1054, %v1055
        %v1057 = vsel %vm478, %v1007, 0.0
        %v1058 = vrot.slane %v1057, 4
        %v1059 = vadd.f32 %v1057, %v1058
        %v1060 = vrot.slane %v1059, 2
        %v1061 = vadd.f32 %v1059, %v1060
        %v1062 = vrot.slane %v1061, 1
        %v1063 = vadd.f32 %v1061, %v1062
        %v1072 = vsel %vm744, %v1021, %v1014
        %v1073 = vsel %vm746, %v1028, %v1072
        %v1074 = vsel %vm748, %v1035, %v1073
        %v1075 = vsel %vm750, %v1042, %v1074
        %v1076 = vsel %vm752, %v1049, %v1075
        %v1077 = vsel %vm754, %v1056, %v1076
        %v1078 = vsel %vm756, %v1063, %v1077
        %v1080 = vadd.f32 %v469, %v1078
        %v1081 = vxor.u32 %v1080, 2147483648
        %v1082 = vmul.f32 %v1081, 1.442695
        %v1083 = vpow.pop %v1082
        %v1084 = vadd.f32 %v1083, 1.0
        %v1085 = vrcp.pop %v1084
        %v1086 = vmul.f32 1.0, %v1085
        %v1087 = vmul.f32 %v1080, %v1086
        %v1088 = vld [vmem:[#allocation12] sm:$0xff]
        %v1089 = vld [vmem:[#allocation12 + $0x8] sm:$0xff]
        %v1090 = vld [vmem:[#allocation12 + $0x10] sm:$0xff]
        %v1091 = vld [vmem:[#allocation12 + $0x18] sm:$0xff]
        %v1092 = vld [vmem:[#allocation12 + $0x20] sm:$0xff]
        %v1093 = vld [vmem:[#allocation12 + $0x28] sm:$0xff]
        %v1094 = vld [vmem:[#allocation12 + $0x30] sm:$0xff]
        %v1095 = vld [vmem:[#allocation12 + $0x38] sm:$0xff]
        %v1096 = vld [vmem:[#allocation12 + $0x40] sm:$0xff]
        %v1097 = vld [vmem:[#allocation12 + $0x48] sm:$0xff]
        %v1098 = vld [vmem:[#allocation12 + $0x50] sm:$0xff]
        %v1099 = vld [vmem:[#allocation12 + $0x58] sm:$0xff]
        %v1100 = vld [vmem:[#allocation12 + $0x60] sm:$0xff]
        %v1101 = vld [vmem:[#allocation12 + $0x68] sm:$0xff]
        %v1102 = vld [vmem:[#allocation12 + $0x70] sm:$0xff]
        %v1103 = vld [vmem:[#allocation12 + $0x78] sm:$0xff]
        %v1104 = vld [vmem:[#allocation12 + $0x80] sm:$0xff]
        %v1105 = vld [vmem:[#allocation12 + $0x88] sm:$0xff]
        %v1106 = vld [vmem:[#allocation12 + $0x90] sm:$0xff]
        %v1107 = vld [vmem:[#allocation12 + $0x98] sm:$0xff]
        %v1108 = vld [vmem:[#allocation12 + $0xa0] sm:$0xff]
        %v1109 = vld [vmem:[#allocation12 + $0xa8] sm:$0xff]
        %v1110 = vld [vmem:[#allocation12 + $0xb0] sm:$0xff]
        %v1111 = vld [vmem:[#allocation12 + $0xb8] sm:$0xff]
        %v1112 = vld [vmem:[#allocation14] sm:$0x7]
        %v1114 = vlaneseq
        %v1115 = vshrl.u32 %v1114, 7
        %v1116 = vsub.s32 0, %v1115
        %v1117 = vrot.slane %v1112, %v1116
        %v1118 = vlaneseq
        %v1119 = vshrl.u32 %v1118, 7
        %v1120 = vsub.s32 1, %v1119
        %v1121 = vrot.slane %v1112, %v1120
        %v1122 = vlaneseq
        %v1123 = vshrl.u32 %v1122, 7
        %v1124 = vsub.s32 2, %v1123
        %v1125 = vrot.slane %v1112, %v1124
        %v1130 = vsel %vm478, %v1087, 0
        %1132 = vmatprep.subr.mxu0 %v1089
        %1133 = vmatpush1.msra.mxu0 %v1088
        %1134 = vmatprep.subr.mxu0 %v1092
        %1135 = vmatpush1.msra.mxu0 %v1091
        %1136 = vmatprep.subr.mxu0 %v1095
        %1137 = vmatpush1.msra.mxu0 %v1094
        %1138 = vmatprep.subr.mxu0 %v1098
        %1139 = vmatpush1.msra.mxu0 %v1097
        %1140 = vmatprep.subr.mxu0 %v1101
        %1141 = vmatpush1.msra.mxu0 %v1100
        %1142 = vmatprep.subr.mxu0 %v1104
        %1143 = vmatpush1.msra.mxu0 %v1103
        %1144 = vmatprep.subr.mxu0 %v1107
        %1145 = vmatpush1.msra.mxu0 %v1106
        %1146 = vmatprep.subr.mxu0 %v1110
        %1147 = vmatpush1.msra.mxu0 %v1109
        %1148 = vmatprep.subr.mxu0 0.0
        %1149 = vmatpush1.msra.mxu0 0.0
        %1150 = vmatprep.subr.mxu0 0.0
        %1151 = vmatpush1.msra.mxu0 0.0
        %1152 = vmatprep.subr.mxu0 0.0
        %1153 = vmatpush1.msra.mxu0 0.0
        %1154 = vmatprep.subr.mxu0 0.0
        %1155 = vmatpush1.msra.mxu0 0.0
        %1156 = vmatprep.subr.mxu0 0.0
        %1157 = vmatpush1.msra.mxu0 0.0
        %1158 = vmatprep.subr.mxu0 0.0
        %1159 = vmatpush1.msra.mxu0 0.0
        %1160 = vmatprep.subr.mxu0 0.0
        %1161 = vmatpush1.msra.mxu0 0.0
        %1162 = vmatprep.subr.mxu0 0.0
        %1163 = vmatpush1.msra.mxu0 0.0
        %1164 = vmatprep.subr.mxu0 0.0
        %1165 = vmatpush1.msra.mxu0 0.0
        %1166 = vmatprep.subr.mxu0 0.0
        %1167 = vmatpush1.msra.mxu0 0.0
        %1168 = vmatprep.subr.mxu0 0.0
        %1169 = vmatpush1.msra.mxu0 0.0
        %1170 = vmatprep.subr.mxu0 0.0
        %1171 = vmatpush1.msra.mxu0 0.0
        %1172 = vmatprep.subr.mxu0 0.0
        %1173 = vmatpush1.msra.mxu0 0.0
        %1174 = vmatprep.subr.mxu0 0.0
        %1175 = vmatpush1.msra.mxu0 0.0
        %1176 = vmatprep.subr.mxu0 0.0
        %1177 = vmatpush1.msra.mxu0 0.0
        %1178 = vmatprep.subr.mxu0 0.0
        %1179 = vmatpush1.msra.mxu0 0.0
        %1180 = vmatprep.subr.mxu0 0.0
        %1181 = vmatpush1.msra.mxu0 0.0
        %1182 = vmatprep.subr.mxu0 0.0
        %1183 = vmatpush1.msra.mxu0 0.0
        %1184 = vmatprep.subr.mxu0 0.0
        %1185 = vmatpush1.msra.mxu0 0.0
        %1186 = vmatprep.subr.mxu0 0.0
        %1187 = vmatpush1.msra.mxu0 0.0
        %1188 = vmatprep.subr.mxu0 0.0
        %1189 = vmatpush1.msra.mxu0 0.0
        %1190 = vmatprep.subr.mxu0 0.0
        %1191 = vmatpush1.msra.mxu0 0.0
        %1192 = vmatprep.subr.mxu0 0.0
        %1193 = vmatpush1.msra.mxu0 0.0
        %1194 = vmatprep.subr.mxu0 0.0
        %1195 = vmatpush1.msra.mxu0 0.0
        %1196 = vmatprep.mubr.f32.mxu0 0.0
        %1197 = vmatmul.mubr.f32.gmra.mrb[0].mxu0 %v1130
        %v1198 = vpop.f32.mrb[0].mxu0
        %v1199 = vadd.f32 %v1117, %v1198
        %v1200 = vpop.f32.mrb[0].mxu0
        %v1201 = vadd.f32 %v1121, %v1200
        %1202 = vdwg.mxu0
        %1203 = vmatprep.subr.mxu0 0.0
        %1204 = vmatpush1.msra.mxu0 %v1090
        %1205 = vmatprep.subr.mxu0 0.0
        %1206 = vmatpush1.msra.mxu0 %v1093
        %1207 = vmatprep.subr.mxu0 0.0
        %1208 = vmatpush1.msra.mxu0 %v1096
        %1209 = vmatprep.subr.mxu0 0.0
        %1210 = vmatpush1.msra.mxu0 %v1099
        %1211 = vmatprep.subr.mxu0 0.0
        %1212 = vmatpush1.msra.mxu0 %v1102
        %1213 = vmatprep.subr.mxu0 0.0
        %1214 = vmatpush1.msra.mxu0 %v1105
        %1215 = vmatprep.subr.mxu0 0.0
        %1216 = vmatpush1.msra.mxu0 %v1108
        %1217 = vmatprep.subr.mxu0 0.0
        %1218 = vmatpush1.msra.mxu0 %v1111
        %1219 = vmatprep.subr.mxu0 0.0
        %1220 = vmatpush1.msra.mxu0 0.0
        %1221 = vmatprep.subr.mxu0 0.0
        %1222 = vmatpush1.msra.mxu0 0.0
        %1223 = vmatprep.subr.mxu0 0.0
        %1224 = vmatpush1.msra.mxu0 0.0
        %1225 = vmatprep.subr.mxu0 0.0
        %1226 = vmatpush1.msra.mxu0 0.0
        %1227 = vmatprep.subr.mxu0 0.0
        %1228 = vmatpush1.msra.mxu0 0.0
        %1229 = vmatprep.subr.mxu0 0.0
        %1230 = vmatpush1.msra.mxu0 0.0
        %1231 = vmatprep.subr.mxu0 0.0
        %1232 = vmatpush1.msra.mxu0 0.0
        %1233 = vmatprep.subr.mxu0 0.0
        %1234 = vmatpush1.msra.mxu0 0.0
        %1235 = vmatprep.subr.mxu0 0.0
        %1236 = vmatpush1.msra.mxu0 0.0
        %1237 = vmatprep.subr.mxu0 0.0
        %1238 = vmatpush1.msra.mxu0 0.0
        %1239 = vmatprep.subr.mxu0 0.0
        %1240 = vmatpush1.msra.mxu0 0.0
        %1241 = vmatprep.subr.mxu0 0.0
        %1242 = vmatpush1.msra.mxu0 0.0
        %1243 = vmatprep.subr.mxu0 0.0
        %1244 = vmatpush1.msra.mxu0 0.0
        %1245 = vmatprep.subr.mxu0 0.0
        %1246 = vmatpush1.msra.mxu0 0.0
        %1247 = vmatprep.subr.mxu0 0.0
        %1248 = vmatpush1.msra.mxu0 0.0
        %1249 = vmatprep.subr.mxu0 0.0
        %1250 = vmatpush1.msra.mxu0 0.0
        %1251 = vmatprep.subr.mxu0 0.0
        %1252 = vmatpush1.msra.mxu0 0.0
        %1253 = vmatprep.subr.mxu0 0.0
        %1254 = vmatpush1.msra.mxu0 0.0
        %1255 = vmatprep.subr.mxu0 0.0
        %1256 = vmatpush1.msra.mxu0 0.0
        %1257 = vmatprep.subr.mxu0 0.0
        %1258 = vmatpush1.msra.mxu0 0.0
        %1259 = vmatprep.subr.mxu0 0.0
        %1260 = vmatpush1.msra.mxu0 0.0
        %1261 = vmatprep.subr.mxu0 0.0
        %1262 = vmatpush1.msra.mxu0 0.0
        %1263 = vmatprep.subr.mxu0 0.0
        %1264 = vmatpush1.msra.mxu0 0.0
        %1265 = vmatprep.subr.mxu0 0.0
        %1266 = vmatpush1.msra.mxu0 0.0
        %1267 = vmatprep.mubr.f32.mxu0 0.0
        %1268 = vmatmul.mubr.f32.gmra.mrb[0].mxu0 %v1130
        %v1269 = vpop.f32.mrb[0].mxu0
        %v1270 = vadd.f32 %v1125, %v1269
        %v1271 = vpop.f32.mrb[0].mxu0
        %1272 = vdwg.mxu0
        %1273 = vst [vmem:[%s466] sm:$0xff] %v1199
        %1274 = vst [vmem:[%s466 + $0x8] sm:$0xff] %v1201
        %1275 = vst [vmem:[%s466 + $0x10] sm:$0xff] %v1270
        %s1276 = sand.u32 %s241, 1
        %s1277 = scalar_lea.sflag [#allocation5], %s1276
        %s1278 = sand.u32 %s241, 1
        %s1279 = smul.addr %s1278, 24
        %s1280 = scalar_lea.vmem [#allocation15], %s1279
        // Predicated region
        $region81: #{adaln_forward.1} parent=51 // pred_check
          %p1281 = pneg %p251
        $region82: #{adaln_forward.1} parent=51 // pred_check_branch
          %1283 = sbr.rel (%p1281) target = $region84
        $region83: #{adaln_forward.1} parent=51 // pred_region
          %s1285 = ssub.s32 384, 384
          %1286 = vsyncadd %s1277, %s1285
          %s1287 = smul.addr %s37, 3
          %s1288 = smul.addr %s36, 3
          %s1289 = sadd.s32 %s1287, %s1288
          %s1290 = smul.addr %s1289, 128
          %s1291 = scalar_lea.hbm %s8, %s1290
          %s1293 = sshll.u32 %s1280, 4
          %s1294 = int_to_ptr.vmem [resolvable:$true] %s1293
          %1296 = dma.vmem_to_hbm [thread:$0]  %s1294, 384, %s1291, %s1277
        $region84: #{adaln_forward.1} parent=51 // pred_fallthru
          _
      $region52: #{adaln_forward.1} parent=5 // pred_fallthru
        _
      %p1297 = scmp.le.s32.totalorder 2, %s27
      // Predicated region
      $region85: #{adaln_forward.1} parent=5 // pred_check
        %p1298 = pneg %p1297
      $region86: #{adaln_forward.1} parent=5 // pred_check_branch
        %1300 = sbr.rel (%p1298) target = $region88
      $region87: #{adaln_forward.1} parent=5 // pred_region
        %s1301 = ssub.s32 %s27, 2
        // Predicated region
        $region89: #{adaln_forward.1} parent=87 // pred_check
          %p1302 = pneg %p257
        $region90: #{adaln_forward.1} parent=87 // pred_check_branch
          %1304 = sbr.rel (%p1302) target = $region92
        $region91: #{adaln_forward.1} parent=87 // pred_region
          %s1305 = sand.u32 %s242, 1
          %s1306 = scalar_lea.sflag [#allocation5], %s1305
          %s1307 = sand.u32 %s242, 1
          %s1308 = smul.addr %s1307, 24
          %s1309 = scalar_lea.vmem [#allocation15], %s1308
          %1310 = dma.done %s1306, 384
        $region92: #{adaln_forward.1} parent=87 // pred_fallthru
          _
      $region88: #{adaln_forward.1} parent=5 // pred_fallthru
        _
    $region6: #{adaln_forward.1} parent=1 // loop_footer
      %s31 = sadd.s32 1, %s27
    $region7: #{adaln_forward.1} parent=1 // loop_footer_branch
      %26 = sbr.rel target = $region3
    $region8: #{adaln_forward.1} parent=1 // loop_exit
      _
    %1311 = vsyncpa [#allocation4], 1
    %s1312 = scalar_lea.sflag [#allocation4], 1
    %1313 = vsyncpa %s1312, 1
    %1314 = vsyncpa [#allocation7], 1
    %s1315 = scalar_lea.sflag [#allocation7], 1
    %1316 = vsyncpa %s1315, 1
    %1317 = vsyncpa [#allocation10], 1
    %1318 = vsyncpa [#allocation13], 1
    %1319 = vsyncpa [#allocation5], 1
    %s1320 = scalar_lea.sflag [#allocation5], 1
    %1321 = vsyncpa %s1320, 1

// kernel: adaln_forward.1
$region0: #{adaln_forward.1}
  #allocation0 [shape = 'u32[]', space=smem, size = 0x4, offset = 0x4, fixed_abs, tag = 'smem constant byte address 0x4 - core index']
  #allocation1 [shape = 'u32[144,128]{1,0:T(1,128)}', space=vmem, size = 0x12000, scoped, tag = 'internal scratch']
  #allocation2 [shape = 'f32[1,1]{1,0:T(1,128)S(1)}', space=vmem, size = 0x200, scoped, tag = 'scoped memory for adaln_forward.1']
  %s0 = inlined_call_operand.hbm [shape: bf16[2,8,8,64], index: 0, kind: input, shape index: {}]
  %s1 = inlined_call_operand.hbm [shape: bf16[2,8,64], index: 1, kind: input, shape index: {}]
  %s2 = inlined_call_operand.hbm [shape: f32[2,1,8], index: 2, kind: input, shape index: {}]
  %s3 = inlined_call_operand.hbm [shape: f32[1,64], index: 3, kind: input, shape index: {}]
  %s4 = inlined_call_operand.hbm [shape: f32[1,64], index: 4, kind: input, shape index: {}]
  %s5 = inlined_call_operand.<no memory space> [shape: f32[1,1], index: 5, kind: input, shape index: {}]
  %s6 = inlined_call_operand.hbm [shape: f32[64,384], index: 6, kind: input, shape index: {}]
  %s7 = inlined_call_operand.hbm [shape: f32[1,384], index: 7, kind: input, shape index: {}]
  %s8 = inlined_call_operand.hbm [shape: f32[2,8,384], index: 8, kind: output, shape index: {}]
  %s9 = sld [smem:[#allocation0]]
  $region93: #{adaln_forward.1} parent=0
    _
  %s11 = ssub.s32 1, %s9
  %s12 = scalar_select 0, %s11, %s9
  %v13 = vstv %s5
  %14 = vst [vmem:[#allocation2] sm:$0x1] %v13
  $region1: #{adaln_forward.1} parent=0
    #allocation3 [shape = 'u8[32768]{0}', space=vmem, size = 0x8000, scoped, tag = 'input window, operand 0']
    #allocation4 [shape = 's32[2]{0}', space=sflag, size = 0x8, scoped, tag = 'scoped memory for adaln_forward.1']
    #allocation5 [shape = 's32[2]{0}', space=sflag, size = 0x8, scoped, tag = 'scoped memory for adaln_forward.1']
    #allocation6 [shape = 'u8[4096]{0}', space=vmem, size = 0x1000, scoped, tag = 'input window, operand 1']
    #allocation7 [shape = 's32[2]{0}', space=sflag, size = 0x8, scoped, tag = 'scoped memory for adaln_forward.1']
    #allocation8 [shape = 'u8[1024]{0}', space=vmem, size = 0x400, scoped, tag = 'input window, operand 2']
    #allocation9 [shape = 'u8[512]{0}', space=vmem, size = 0x400, scoped, tag = 'input window, operand 3, single buffered']
    #allocation10 [shape = 's32[1]{0}', space=sflag, size = 0x4, scoped, tag = 'scoped memory for adaln_forward.1']
    #allocation11 [shape = 'u8[512]{0}', space=vmem, size = 0x400, scoped, tag = 'input window, operand 4, single buffered']
    #allocation12 [shape = 'u8[98304]{0}', space=vmem, size = 0x18000, scoped, tag = 'input window, operand 6, single buffered']
    #allocation13 [shape = 's32[1]{0}', space=sflag, size = 0x4, scoped, tag = 'scoped memory for adaln_forward.1']
    #allocation14 [shape = 'u8[1536]{0}', space=vmem, size = 0x800, scoped, tag = 'input window, operand 7, single buffered']
    #allocation15 [shape = 'u8[24576]{0}', space=vmem, size = 0x6000, scoped, tag = 'output window, operand 0']
    %15 = vsyncpa [#allocation4], 0
    %s16 = scalar_lea.sflag [#allocation4], 1
    %17 = vsyncpa %s16, 0
    %18 = vsyncpa [#allocation7], 0
    %s19 = scalar_lea.sflag [#allocation7], 1
    %20 = vsyncpa %s19, 0
    %21 = vsyncpa [#allocation10], 0
    %22 = vsyncpa [#allocation13], 0
    %23 = vsyncpa [#allocation5], 0
    %s24 = scalar_lea.sflag [#allocation5], 1
    %25 = vsyncpa %s24, 0
    loop: start=0, step=1, limit=4
    $region2: #{adaln_forward.1} parent=1 // loop_pre_header
      _
    $region3: #{adaln_forward.1} parent=1 // loop_header
      %s27 = sphi 0, %s31
      %p28 = scmp.ge.s32.totalorder %s27, 4
      %s34 = sphi 0, %s46
      %s35 = sphi 0, %s42
      %s36 = sphi 0, %s34
      %s37 = sphi 0, %s35
      %s38 = sphi 0, %s36
      %s39 = sphi 0, %s37
      %s51 = sphi 0, %s53
      %s54 = sphi 0, %s51
      %s55 = sphi 0, %s54
      %s71 = sphi 0, %s55
      %s79 = sphi 0, %s81
      %s82 = sphi 0, %s79
      %s83 = sphi 0, %s82
      %s99 = sphi 0, %s83
      %s105 = sphi 0, %s107
      %s108 = sphi 0, %s105
      %s109 = sphi 0, %s108
      %s125 = sphi 0, %s109
      %s129 = sphi 0, %s129
      %s131 = sphi 0, %s129
      %s132 = sphi 0, %s131
      %s146 = sphi 0, %s132
      %s150 = sphi 0, %s150
      %s152 = sphi 0, %s150
      %s153 = sphi 0, %s152
      %s167 = sphi 0, %s153
      %s171 = sphi 0, %s171
      %s173 = sphi 0, %s171
      %s174 = sphi 0, %s173
      %s188 = sphi 0, %s174
      %s192 = sphi 0, %s192
      %s194 = sphi 0, %s192
      %s195 = sphi 0, %s194
      %s209 = sphi 0, %s195
      %s213 = sphi 0, %s213
      %s215 = sphi 0, %s213
      %s216 = sphi 0, %s215
      %s230 = sphi 0, %s216
      %s238 = sphi 0, %s240
      %s241 = sphi 0, %s238
      %s242 = sphi 0, %s241
      %s258 = sphi 0, %s242
    $region4: #{adaln_forward.1} parent=1 // loop_header_branch
      %30 = sbr.rel (%p28) target = $region8
    $region5: #{adaln_forward.1} parent=1 // loop_body
      %s32 = ssub.s32 %s27, 1
      %s33 = ssub.s32 %s27, 2
      %s40 = sadd.s32 1, %s35
      %p41 = scmp.ge.s32.totalorder %s40, 1
      %s42 = scalar_select %p41, 0, %s40
      %s43 = sadd.s32 1, %s34
      %s44 = scalar_select %p41, %s43, %s34
      %p45 = scmp.ge.s32.totalorder %s44, 2
      %s46 = scalar_select %p45, 0, %s44
      %s47 = ssub.s32 %s34, %s46
      %s48 = ssub.s32 %s35, %s42
      %s49 = sor.u32 %s47, %s48
      %p50 = scmp.eq.s32.totalorder %s49, 0
      %s52 = sadd.s32 %s51, 1
      %s53 = scalar_select %p50, %s51, %s52
      %p56 = pneg %p50
      %p57 = scmp.eq.s32.totalorder %s27, 1
      %p58 = por %p56, %p57
      %p59 = scmp.ne.s32.totalorder %s51, %s54
      %p60 = scmp.eq.s32.totalorder %s27, 0
      %p61 = por %p59, %p60
      %p62 = scmp.ne.s32.totalorder %s51, %s54
      %p63 = scmp.eq.s32.totalorder %s32, 1
      %p64 = por %p62, %p63
      %p65 = scmp.ne.s32.totalorder %s54, %s55
      %p66 = scmp.eq.s32.totalorder %s32, 0
      %p67 = por %p65, %p66
      %p68 = scmp.ne.s32.totalorder %s54, %s55
      %p69 = scmp.eq.s32.totalorder %s33, 1
      %p70 = por %p68, %p69
      %p72 = scmp.ne.s32.totalorder %s55, %s71
      %p73 = scmp.eq.s32.totalorder %s33, 0
      %p74 = por %p72, %p73
      %s75 = ssub.s32 %s34, %s46
      %s76 = ssub.s32 %s35, %s42
      %s77 = sor.u32 %s75, %s76
      %p78 = scmp.eq.s32.totalorder %s77, 0
      %s80 = sadd.s32 %s79, 1
      %s81 = scalar_select %p78, %s79, %s80
      %p84 = pneg %p78
      %p85 = scmp.eq.s32.totalorder %s27, 1
      %p86 = por %p84, %p85
      %p87 = scmp.ne.s32.totalorder %s79, %s82
      %p88 = scmp.eq.s32.totalorder %s27, 0
      %p89 = por %p87, %p88
      %p90 = scmp.ne.s32.totalorder %s79, %s82
      %p91 = scmp.eq.s32.totalorder %s32, 1
      %p92 = por %p90, %p91
      %p93 = scmp.ne.s32.totalorder %s82, %s83
      %p94 = scmp.eq.s32.totalorder %s32, 0
      %p95 = por %p93, %p94
      %p96 = scmp.ne.s32.totalorder %s82, %s83
      %p97 = scmp.eq.s32.totalorder %s33, 1
      %p98 = por %p96, %p97
      %p100 = scmp.ne.s32.totalorder %s83, %s99
      %p101 = scmp.eq.s32.totalorder %s33, 0
      %p102 = por %p100, %p101
      %s103 = ssub.s32 %s34, %s46
      %p104 = scmp.eq.s32.totalorder %s103, 0
      %s106 = sadd.s32 %s105, 1
      %s107 = scalar_select %p104, %s105, %s106
      %p110 = pneg %p104
      %p111 = scmp.eq.s32.totalorder %s27, 1
      %p112 = por %p110, %p111
      %p113 = scmp.ne.s32.totalorder %s105, %s108
      %p114 = scmp.eq.s32.totalorder %s27, 0
      %p115 = por %p113, %p114
      %p116 = scmp.ne.s32.totalorder %s105, %s108
      %p117 = scmp.eq.s32.totalorder %s32, 1
      %p118 = por %p116, %p117
      %p119 = scmp.ne.s32.totalorder %s108, %s109
      %p120 = scmp.eq.s32.totalorder %s32, 0
      %p121 = por %p119, %p120
      %p122 = scmp.ne.s32.totalorder %s108, %s109
      %p123 = scmp.eq.s32.totalorder %s33, 1
      %p124 = por %p122, %p123
      %p126 = scmp.ne.s32.totalorder %s109, %s125
      %p127 = scmp.eq.s32.totalorder %s33, 0
      %p128 = por %p126, %p127
      %s130 = sadd.s32 %s129, 1
      %p133 = scmp.eq.s32.totalorder %s27, 1
      %p134 = scmp.ne.s32.totalorder %s129, %s131
      %p135 = scmp.eq.s32.totalorder %s27, 0
      %p136 = por %p134, %p135
      %p137 = scmp.ne.s32.totalorder %s129, %s131
      %p138 = scmp.eq.s32.totalorder %s32, 1
      %p139 = por %p137, %p138
      %p140 = scmp.ne.s32.totalorder %s131, %s132
      %p141 = scmp.eq.s32.totalorder %s32, 0
      %p142 = por %p140, %p141
      %p143 = scmp.ne.s32.totalorder %s131, %s132
      %p144 = scmp.eq.s32.totalorder %s33, 1
      %p145 = por %p143, %p144
      %p147 = scmp.ne.s32.totalorder %s132, %s146
      %p148 = scmp.eq.s32.totalorder %s33, 0
      %p149 = por %p147, %p148
      %s151 = sadd.s32 %s150, 1
      %p154 = scmp.eq.s32.totalorder %s27, 1
      %p155 = scmp.ne.s32.totalorder %s150, %s152
      %p156 = scmp.eq.s32.totalorder %s27, 0
      %p157 = por %p155, %p156
      %p158 = scmp.ne.s32.totalorder %s150, %s152
      %p159 = scmp.eq.s32.totalorder %s32, 1
      %p160 = por %p158, %p159
      %p161 = scmp.ne.s32.totalorder %s152, %s153
      %p162 = scmp.eq.s32.totalorder %s32, 0
      %p163 = por %p161, %p162
      %p164 = scmp.ne.s32.totalorder %s152, %s153
      %p165 = scmp.eq.s32.totalorder %s33, 1
      %p166 = por %p164, %p165
      %p168 = scmp.ne.s32.totalorder %s153, %s167
      %p169 = scmp.eq.s32.totalorder %s33, 0
      %p170 = por %p168, %p169
      %s172 = sadd.s32 %s171, 1
      %p175 = scmp.eq.s32.totalorder %s27, 1
      %p176 = scmp.ne.s32.totalorder %s171, %s173
      %p177 = scmp.eq.s32.totalorder %s27, 0
      %p178 = por %p176, %p177
      %p179 = scmp.ne.s32.totalorder %s171, %s173
      %p180 = scmp.eq.s32.totalorder %s32, 1
      %p181 = por %p179, %p180
      %p182 = scmp.ne.s32.totalorder %s173, %s174
      %p183 = scmp.eq.s32.totalorder %s32, 0
      %p184 = por %p182, %p183
      %p185 = scmp.ne.s32.totalorder %s173, %s174
      %p186 = scmp.eq.s32.totalorder %s33, 1
      %p187 = por %p185, %p186
      %p189 = scmp.ne.s32.totalorder %s174, %s188
      %p190 = scmp.eq.s32.totalorder %s33, 0
      %p191 = por %p189, %p190
      %s193 = sadd.s32 %s192, 1
      %p196 = scmp.eq.s32.totalorder %s27, 1
      %p197 = scmp.ne.s32.totalorder %s192, %s194
      %p198 = scmp.eq.s32.totalorder %s27, 0
      %p199 = por %p197, %p198
      %p200 = scmp.ne.s32.totalorder %s192, %s194
      %p201 = scmp.eq.s32.totalorder %s32, 1
      %p202 = por %p200, %p201
      %p203 = scmp.ne.s32.totalorder %s194, %s195
      %p204 = scmp.eq.s32.totalorder %s32, 0
      %p205 = por %p203, %p204
      %p206 = scmp.ne.s32.totalorder %s194, %s195
      %p207 = scmp.eq.s32.totalorder %s33, 1
      %p208 = por %p206, %p207
      %p210 = scmp.ne.s32.totalorder %s195, %s209
      %p211 = scmp.eq.s32.totalorder %s33, 0
      %p212 = por %p210, %p211
      %s214 = sadd.s32 %s213, 1
      %p217 = scmp.eq.s32.totalorder %s27, 1
      %p218 = scmp.ne.s32.totalorder %s213, %s215
      %p219 = scmp.eq.s32.totalorder %s27, 0
      %p220 = por %p218, %p219
      %p221 = scmp.ne.s32.totalorder %s213, %s215
      %p222 = scmp.eq.s32.totalorder %s32, 1
      %p223 = por %p221, %p222
      %p224 = scmp.ne.s32.totalorder %s215, %s216
      %p225 = scmp.eq.s32.totalorder %s32, 0
      %p226 = por %p224, %p225
      %p227 = scmp.ne.s32.totalorder %s215, %s216
      %p228 = scmp.eq.s32.totalorder %s33, 1
      %p229 = por %p227, %p228
      %p231 = scmp.ne.s32.totalorder %s216, %s230
      %p232 = scmp.eq.s32.totalorder %s33, 0
      %p233 = por %p231, %p232
      %s234 = ssub.s32 %s34, %s46
      %s235 = ssub.s32 %s35, %s42
      %s236 = sor.u32 %s234, %s235
      %p237 = scmp.eq.s32.totalorder %s236, 0
      %s239 = sadd.s32 %s238, 1
      %s240 = scalar_select %p237, %s238, %s239
      %p243 = pneg %p237
      %p244 = scmp.eq.s32.totalorder %s27, 1
      %p245 = por %p243, %p244
      %p246 = scmp.ne.s32.totalorder %s238, %s241
      %p247 = scmp.eq.s32.totalorder %s27, 0
      %p248 = por %p246, %p247
      %p249 = scmp.ne.s32.totalorder %s238, %s241
      %p250 = scmp.eq.s32.totalorder %s32, 1
      %p251 = por %p249, %p250
      %p252 = scmp.ne.s32.totalorder %s241, %s242
      %p253 = scmp.eq.s32.totalorder %s32, 0
      %p254 = por %p252, %p253
      %p255 = scmp.ne.s32.totalorder %s241, %s242
      %p256 = scmp.eq.s32.totalorder %s33, 1
      %p257 = por %p255, %p256
      %p259 = scmp.ne.s32.totalorder %s242, %s258
      %p260 = scmp.eq.s32.totalorder %s33, 0
      %p261 = por %p259, %p260
      %p262 = scmp.le.s32.totalorder 1, %s27
      %p263 = scmp.lt.s32.totalorder %s27, 3
      %p264 = pnand %p262, %p263
      %p265 = pneg %p264
      // Predicated region
      $region9: #{adaln_forward.1} parent=5 // pred_check
        _
      $region10: #{adaln_forward.1} parent=5 // pred_check_branch
        %267 = sbr.rel (%p264) target = $region12
      $region11: #{adaln_forward.1} parent=5 // pred_region
        %s268 = ssub.s32 %s27, 1
        // Predicated region
        $region13: #{adaln_forward.1} parent=11 // pred_check
          %p269 = pneg %p142
        $region14: #{adaln_forward.1} parent=11 // pred_check_branch
          %271 = sbr.rel (%p269) target = $region16
        $region15: #{adaln_forward.1} parent=11 // pred_region
          %s273 = ssub.s32 16, 16
          %274 = vsyncadd [#allocation10], %s273
          %s276 = sshll.u32 [#allocation9], 4
          %s277 = int_to_ptr.vmem [resolvable:$true] %s276
          %279 = dma.hbm_to_vmem [thread:$0]  %s3, 16, %s277, [#allocation10]
        $region16: #{adaln_forward.1} parent=11 // pred_fallthru
          _
        // Predicated region
        $region17: #{adaln_forward.1} parent=11 // pred_check
          %p280 = pneg %p163
        $region18: #{adaln_forward.1} parent=11 // pred_check_branch
          %282 = sbr.rel (%p280) target = $region20
        $region19: #{adaln_forward.1} parent=11 // pred_region
          %s284 = ssub.s32 16, 16
          %285 = vsyncadd [#allocation10], %s284
          %s287 = sshll.u32 [#allocation11], 4
          %s288 = int_to_ptr.vmem [resolvable:$true] %s287
          %290 = dma.hbm_to_vmem [thread:$0]  %s4, 16, %s288, [#allocation10]
        $region20: #{adaln_forward.1} parent=11 // pred_fallthru
          _
        // Predicated region
        $region21: #{adaln_forward.1} parent=11 // pred_check
          %p291 = pneg %p184
        $region22: #{adaln_forward.1} parent=11 // pred_check_branch
          %293 = sbr.rel (%p291) target = $region24
        $region23: #{adaln_forward.1} parent=11 // pred_region
          _
        $region24: #{adaln_forward.1} parent=11 // pred_fallthru
          _
        // Predicated region
        $region25: #{adaln_forward.1} parent=11 // pred_check
          %p294 = pneg %p205
        $region26: #{adaln_forward.1} parent=11 // pred_check_branch
          %296 = sbr.rel (%p294) target = $region28
        $region27: #{adaln_forward.1} parent=11 // pred_region
          %s298 = ssub.s32 3072, 3072
          %299 = vsyncadd [#allocation13], %s298
          %s300 = sshll.u32 [#allocation12], 4
          %s301 = int_to_ptr.vmem [resolvable:$true] %s300
          %306 = dma.hbm_to_vmem [thread:$0]  %s6, 3072, %s301, [#allocation13], 384, 384, 24
        $region28: #{adaln_forward.1} parent=11 // pred_fallthru
          _
        // Predicated region
        $region29: #{adaln_forward.1} parent=11 // pred_check
          %p307 = pneg %p226
        $region30: #{adaln_forward.1} parent=11 // pred_check_branch
          %309 = sbr.rel (%p307) target = $region32
        $region31: #{adaln_forward.1} parent=11 // pred_region
          %s311 = ssub.s32 48, 48
          %312 = vsyncadd [#allocation13], %s311
          %s314 = sshll.u32 [#allocation14], 4
          %s315 = int_to_ptr.vmem [resolvable:$true] %s314
          %317 = dma.hbm_to_vmem [thread:$0]  %s7, 48, %s315, [#allocation13]
        $region32: #{adaln_forward.1} parent=11 // pred_fallthru
          _
      $region12: #{adaln_forward.1} parent=5 // pred_fallthru
        _
      %p318 = scmp.lt.s32.totalorder %s27, 2
      // Predicated region
      $region33: #{adaln_forward.1} parent=5 // pred_check
        %p319 = pneg %p318
      $region34: #{adaln_forward.1} parent=5 // pred_check_branch
        %321 = sbr.rel (%p319) target = $region36
      $region35: #{adaln_forward.1} parent=5 // pred_region
        // Predicated region
        $region37: #{adaln_forward.1} parent=35 // pred_check
          %p322 = pneg %p61
        $region38: #{adaln_forward.1} parent=35 // pred_check_branch
          %324 = sbr.rel (%p322) target = $region40
        $region39: #{adaln_forward.1} parent=35 // pred_region
          %s325 = sand.u32 %s51, 1
          %s326 = scalar_lea.sflag [#allocation4], %s325
          %s327 = sand.u32 %s51, 1
          %s328 = smul.addr %s327, 32
          %s329 = scalar_lea.vmem [#allocation3], %s328
          %s330 = smul.u32 8, %s35
          %s332 = ssub.s32 512, 512
          %333 = vsyncadd %s326, %s332
          %s334 = smul.addr %s34, 8
          %s335 = sadd.s32 %s330, %s334
          %s336 = smul.addr %s335, 64
          %s337 = scalar_lea.hbm %s0, %s336
          %s338 = sshll.u32 %s329, 4
          %s339 = int_to_ptr.vmem [resolvable:$true] %s338
          %344 = dma.hbm_to_vmem [thread:$0]  %s337, 512, %s339, %s326, 64, 64, 4
        $region40: #{adaln_forward.1} parent=35 // pred_fallthru
          _
        // Predicated region
        $region41: #{adaln_forward.1} parent=35 // pred_check
          %p345 = pneg %p89
        $region42: #{adaln_forward.1} parent=35 // pred_check_branch
          %347 = sbr.rel (%p345) target = $region44
        $region43: #{adaln_forward.1} parent=35 // pred_region
          %s348 = sand.u32 %s27, 1
          %s349 = scalar_lea.sflag [#allocation7], %s348
          %s350 = sand.u32 %s79, 1
          %s351 = smul.addr %s350, 4
          %s352 = scalar_lea.vmem [#allocation6], %s351
          %s354 = ssub.s32 64, 64
          %355 = vsyncadd %s349, %s354
          %s356 = sadd.s32 %s35, %s34
          %s357 = smul.addr %s356, 64
          %s358 = scalar_lea.hbm %s1, %s357
          %s360 = sshll.u32 %s352, 4
          %s361 = int_to_ptr.vmem [resolvable:$true] %s360
          %363 = dma.hbm_to_vmem [thread:$0]  %s358, 64, %s361, %s349
        $region44: #{adaln_forward.1} parent=35 // pred_fallthru
          _
        // Predicated region
        $region45: #{adaln_forward.1} parent=35 // pred_check
          %p364 = pneg %p115
        $region46: #{adaln_forward.1} parent=35 // pred_check_branch
          %366 = sbr.rel (%p364) target = $region48
        $region47: #{adaln_forward.1} parent=35 // pred_region
          %s367 = sand.u32 %s27, 1
          %s368 = scalar_lea.sflag [#allocation7], %s367
          %s369 = sand.u32 %s105, 1
          %s370 = scalar_lea.vmem [#allocation8], %s369
          %s372 = ssub.s32 16, 16
          %373 = vsyncadd %s368, %s372
          %s374 = smul.addr %s34, 16
          %s375 = scalar_lea.hbm %s2, %s374
          %s377 = sshll.u32 %s370, 4
          %s378 = int_to_ptr.vmem [resolvable:$true] %s377
          %380 = dma.hbm_to_vmem [thread:$0]  %s375, 16, %s378, %s368
        $region48: #{adaln_forward.1} parent=35 // pred_fallthru
          _
      $region36: #{adaln_forward.1} parent=5 // pred_fallthru
        _
      %p381 = scmp.le.s32.totalorder 1, %s27
      %p382 = scmp.lt.s32.totalorder %s27, 3
      %p383 = pnand %p381, %p382
      %p384 = pneg %p383
      // Predicated region
      $region49: #{adaln_forward.1} parent=5 // pred_check
        _
      $region50: #{adaln_forward.1} parent=5 // pred_check_branch
        %386 = sbr.rel (%p383) target = $region52
      $region51: #{adaln_forward.1} parent=5 // pred_region
        %s387 = ssub.s32 %s27, 1
        %s388 = sand.u32 %s54, 1
        %s389 = scalar_lea.sflag [#allocation4], %s388
        %s390 = sand.u32 %s54, 1
        %s391 = smul.addr %s390, 32
        %s392 = scalar_lea.vmem [#allocation3], %s391
        // Predicated region
        $region53: #{adaln_forward.1} parent=51 // pred_check
          %p393 = pneg %p67
        $region54: #{adaln_forward.1} parent=51 // pred_check_branch
          %395 = sbr.rel (%p393) target = $region56
        $region55: #{adaln_forward.1} parent=51 // pred_region
          %396 = dma.done %s389, 512
        $region56: #{adaln_forward.1} parent=51 // pred_fallthru
          _
        %s397 = sand.u32 %s32, 1
        %s398 = scalar_lea.sflag [#allocation7], %s397
        %s399 = sand.u32 %s82, 1
        %s400 = smul.addr %s399, 4
        %s401 = scalar_lea.vmem [#allocation6], %s400
        // Predicated region
        $region57: #{adaln_forward.1} parent=51 // pred_check
          %p402 = pneg %p95
        $region58: #{adaln_forward.1} parent=51 // pred_check_branch
          %404 = sbr.rel (%p402) target = $region60
        $region59: #{adaln_forward.1} parent=51 // pred_region
          %405 = dma.done %s398, 64
        $region60: #{adaln_forward.1} parent=51 // pred_fallthru
          _
        %s406 = sand.u32 %s32, 1
        %s407 = scalar_lea.sflag [#allocation7], %s406
        %s408 = sand.u32 %s108, 1
        %s409 = scalar_lea.vmem [#allocation8], %s408
        // Predicated region
        $region61: #{adaln_forward.1} parent=51 // pred_check
          %p410 = pneg %p121
        $region62: #{adaln_forward.1} parent=51 // pred_check_branch
          %412 = sbr.rel (%p410) target = $region64
        $region63: #{adaln_forward.1} parent=51 // pred_region
          %413 = dma.done %s407, 16
        $region64: #{adaln_forward.1} parent=51 // pred_fallthru
          _
        // Predicated region
        $region65: #{adaln_forward.1} parent=51 // pred_check
          %p414 = pneg %p142
        $region66: #{adaln_forward.1} parent=51 // pred_check_branch
          %416 = sbr.rel (%p414) target = $region68
        $region67: #{adaln_forward.1} parent=51 // pred_region
          %417 = dma.done [#allocation10], 16
        $region68: #{adaln_forward.1} parent=51 // pred_fallthru
          _
        // Predicated region
        $region69: #{adaln_forward.1} parent=51 // pred_check
          %p418 = pneg %p163
        $region70: #{adaln_forward.1} parent=51 // pred_check_branch
          %420 = sbr.rel (%p418) target = $region72
        $region71: #{adaln_forward.1} parent=51 // pred_region
          %421 = dma.done [#allocation10], 16
        $region72: #{adaln_forward.1} parent=51 // pred_fallthru
          _
        // Predicated region
        $region73: #{adaln_forward.1} parent=51 // pred_check
          %p422 = pneg %p205
        $region74: #{adaln_forward.1} parent=51 // pred_check_branch
          %424 = sbr.rel (%p422) target = $region76
        $region75: #{adaln_forward.1} parent=51 // pred_region
          %425 = dma.done [#allocation13], 3072
        $region76: #{adaln_forward.1} parent=51 // pred_fallthru
          _
        // Predicated region
        $region77: #{adaln_forward.1} parent=51 // pred_check
          %p426 = pneg %p226
        $region78: #{adaln_forward.1} parent=51 // pred_check_branch
          %428 = sbr.rel (%p426) target = $region80
        $region79: #{adaln_forward.1} parent=51 // pred_region
          %429 = dma.done [#allocation13], 48
        $region80: #{adaln_forward.1} parent=51 // pred_fallthru
          _
        %s430 = sand.u32 %s54, 1
        %s431 = scalar_lea.sflag [#allocation4], %s430
        %s432 = sand.u32 %s54, 1
        %s433 = smul.addr %s432, 32
        %s434 = scalar_lea.vmem [#allocation3], %s433
        %p435 = pneg %p67
        %p436 = pneg %p64
        %s437 = sand.u32 %s32, 1
        %s438 = scalar_lea.sflag [#allocation7], %s437
        %s439 = sand.u32 %s82, 1
        %s440 = smul.addr %s439, 4
        %s441 = scalar_lea.vmem [#allocation6], %s440
        %p442 = pneg %p95
        %p443 = pneg %p92
        %s444 = sand.u32 %s32, 1
        %s445 = scalar_lea.sflag [#allocation7], %s444
        %s446 = sand.u32 %s108, 1
        %s447 = scalar_lea.vmem [#allocation8], %s446
        %p448 = pneg %p121
        %p449 = pneg %p118
        %p450 = pneg %p142
        %p451 = pneg %p139
        %p452 = pneg %p163
        %p453 = pneg %p160
        %p454 = pneg %p184
        %p455 = pneg %p181
        %p456 = pneg %p205
        %p457 = pneg %p202
        %p458 = pneg %p226
        %p459 = pneg %p223
        %p460 = pneg %p254
        %p461 = pneg %p251
        %s462 = sand.u32 %s241, 1
        %s463 = scalar_lea.sflag [#allocation5], %s462
        %s464 = sand.u32 %s241, 1
        %s465 = smul.addr %s464, 24
        %s466 = scalar_lea.vmem [#allocation15], %s465
        %s467 = smul.u32 8, %s37
        %v468 = vld [vmem:[%s401] sm:$0xf]
        %v469 = vunpack.c.l.bf16 %v468
        %v470 = vld [vmem:[#allocation9] sm:$0x1]
        %v472 = vlaneseq
        %v473 = vshrl.u32 %v472, 7
        %v474 = vsub.s32 0, %v473
        %v475 = vrot.slane %v470, %v474
        %v477 = vmul.f32 %v469, %v475
        %vm478 = vcmask 523264
        %v479 = vsel %vm478, %v477, 0.0
        %480 = vadd.xlane.f32.xlu0 %v479
        %v481 = vpop.xlane.xlu0 %480
        %v482 = vld [vmem:[%s392] sm:$0xf]
        %v483 = vld [vmem:[%s392 + $0x4] sm:$0xf]
        %v484 = vld [vmem:[%s392 + $0x8] sm:$0xf]
        %v485 = vld [vmem:[%s392 + $0xc] sm:$0xf]
        %v486 = vld [vmem:[%s392 + $0x10] sm:$0xf]
        %v487 = vld [vmem:[%s392 + $0x14] sm:$0xf]
        %v488 = vld [vmem:[%s392 + $0x18] sm:$0xf]
        %v489 = vld [vmem:[%s392 + $0x1c] sm:$0xf]
        %v490 = vld [vmem:[#allocation11] sm:$0x1]
        %v491 = vunpack.c.l.bf16 %v482
        %v492 = vunpack.c.l.bf16 %v483
        %v493 = vunpack.c.l.bf16 %v484
        %v494 = vunpack.c.l.bf16 %v485
        %v495 = vunpack.c.l.bf16 %v486
        %v496 = vunpack.c.l.bf16 %v487
        %v497 = vunpack.c.l.bf16 %v488
        %v498 = vunpack.c.l.bf16 %v489
        %v500 = vlaneseq
        %v501 = vshrl.u32 %v500, 7
        %v502 = vsub.s32 0, %v501
        %v503 = vrot.slane %v490, %v502
        %v505 = vmul.f32 %v491, %v503
        %v506 = vmul.f32 %v492, %v503
        %v507 = vmul.f32 %v493, %v503
        %v508 = vmul.f32 %v494, %v503
        %v509 = vmul.f32 %v495, %v503
        %v510 = vmul.f32 %v496, %v503
        %v511 = vmul.f32 %v497, %v503
        %v512 = vmul.f32 %v498, %v503
        %v513 = vsel %vm478, %v505, 0.0
        %514 = vadd.xlane.f32.xlu0 %v513
        %v515 = vpop.xlane.xlu0 %514
        %v516 = vsel %vm478, %v506, 0.0
        %517 = vadd.xlane.f32.xlu0 %v516
        %v518 = vpop.xlane.xlu0 %517
        %v519 = vsel %vm478, %v507, 0.0
        %520 = vadd.xlane.f32.xlu0 %v519
        %v521 = vpop.xlane.xlu0 %520
        %v522 = vsel %vm478, %v508, 0.0
        %523 = vadd.xlane.f32.xlu0 %v522
        %v524 = vpop.xlane.xlu0 %523
        %v525 = vsel %vm478, %v509, 0.0
        %526 = vadd.xlane.f32.xlu0 %v525
        %v527 = vpop.xlane.xlu0 %526
        %v528 = vsel %vm478, %v510, 0.0
        %529 = vadd.xlane.f32.xlu0 %v528
        %v530 = vpop.xlane.xlu0 %529
        %v531 = vsel %vm478, %v511, 0.0
        %532 = vadd.xlane.f32.xlu0 %v531
        %v533 = vpop.xlane.xlu0 %532
        %v534 = vsel %vm478, %v512, 0.0
        %535 = vadd.xlane.f32.xlu0 %v534
        %v536 = vpop.xlane.xlu0 %535
        %v538 = vlaneseq
        %v539 = vshrl.u32 %v538, 7
        %v540 = vsub.s32 0, %v539
        %v541 = vrot.slane %v481, %v540
        %v542 = vlaneseq
        %v543 = vshrl.u32 %v542, 7
        %v544 = vsub.s32 1, %v543
        %v545 = vrot.slane %v481, %v544
        %v546 = vlaneseq
        %v547 = vshrl.u32 %v546, 7
        %v548 = vsub.s32 2, %v547
        %v549 = vrot.slane %v481, %v548
        %v550 = vlaneseq
        %v551 = vshrl.u32 %v550, 7
        %v552 = vsub.s32 3, %v551
        %v553 = vrot.slane %v481, %v552
        %v554 = vlaneseq
        %v555 = vshrl.u32 %v554, 7
        %v556 = vsub.s32 4, %v555
        %v557 = vrot.slane %v481, %v556
        %v558 = vlaneseq
        %v559 = vshrl.u32 %v558, 7
        %v560 = vsub.s32 5, %v559
        %v561 = vrot.slane %v481, %v560
        %v562 = vlaneseq
        %v563 = vshrl.u32 %v562, 7
        %v564 = vsub.s32 6, %v563
        %v565 = vrot.slane %v481, %v564
        %v566 = vlaneseq
        %v567 = vshrl.u32 %v566, 7
        %v568 = vsub.s32 7, %v567
        %v569 = vrot.slane %v481, %v568
        %v578 = vadd.f32 %v515, %v541
        %v579 = vadd.f32 %v518, %v545
        %v580 = vadd.f32 %v521, %v549
        %v581 = vadd.f32 %v524, %v553
        %v582 = vadd.f32 %v527, %v557
        %v583 = vadd.f32 %v530, %v561
        %v584 = vadd.f32 %v533, %v565
        %v585 = vadd.f32 %v536, %v569
        %v586 = vld [vmem:[%s409] sm:$0x1]
        %v588 = vlaneseq
        %v589 = vshrl.u32 %v588, 7
        %v590 = vsub.s32 0, %v589
        %v591 = vrot.slane %v586, %v590
        %593 = vbcast.lane.b32.xlu0 %v591, 256
        %v594 = vpop.permute.xlu0 %593
        %v596 = vadd.f32 %v578, %v594
        %v597 = vadd.f32 %v579, %v594
        %v598 = vadd.f32 %v580, %v594
        %v599 = vadd.f32 %v581, %v594
        %v600 = vadd.f32 %v582, %v594
        %v601 = vadd.f32 %v583, %v594
        %v602 = vadd.f32 %v584, %v594
        %v603 = vadd.f32 %v585, %v594
        %v604 = vld [vmem:[#allocation2] sm:$0x1]
        %v606 = vlaneseq
        %v607 = vshrl.u32 %v606, 7
        %v608 = vsub.s32 0, %v607
        %v609 = vrot.slane %v604, %v608
        %610 = vset.pattern.permute.xlu0 0
        %611 = vperm.xlu0 %610, %v609
        %v612 = vpop.permute.xlu0 %611
        %v614 = vadd.f32 %v596, %v612
        %v615 = vadd.f32 %v597, %v612
        %v616 = vadd.f32 %v598, %v612
        %v617 = vadd.f32 %v599, %v612
        %v618 = vadd.f32 %v600, %v612
        %v619 = vadd.f32 %v601, %v612
        %v620 = vadd.f32 %v602, %v612
        %v621 = vadd.f32 %v603, %v612
        %v622 = vxor.u32 %v614, 2147483648
        %v623 = vxor.u32 %v615, 2147483648
        %v624 = vxor.u32 %v616, 2147483648
        %v625 = vxor.u32 %v617, 2147483648
        %v626 = vxor.u32 %v618, 2147483648
        %v627 = vxor.u32 %v619, 2147483648
        %v628 = vxor.u32 %v620, 2147483648
        %v629 = vxor.u32 %v621, 2147483648
        %v630 = vmul.f32 %v622, 1.442695
        %v631 = vpow.pop %v630
        %v632 = vmul.f32 %v623, 1.442695
        %v633 = vpow.pop %v632
        %v634 = vmul.f32 %v624, 1.442695
        %v635 = vpow.pop %v634
        %v636 = vmul.f32 %v625, 1.442695
        %v637 = vpow.pop %v636
        %v638 = vmul.f32 %v626, 1.442695
        %v639 = vpow.pop %v638
        %v640 = vmul.f32 %v627, 1.442695
        %v641 = vpow.pop %v640
        %v642 = vmul.f32 %v628, 1.442695
        %v643 = vpow.pop %v642
        %v644 = vmul.f32 %v629, 1.442695
        %v645 = vpow.pop %v644
        %v646 = vadd.f32 %v631, 1.0
        %v647 = vadd.f32 %v633, 1.0
        %v648 = vadd.f32 %v635, 1.0
        %v649 = vadd.f32 %v637, 1.0
        %v650 = vadd.f32 %v639, 1.0
        %v651 = vadd.f32 %v641, 1.0
        %v652 = vadd.f32 %v643, 1.0
        %v653 = vadd.f32 %v645, 1.0
        %v654 = vrcp.pop %v646
        %v655 = vmul.f32 1.0, %v654
        %v656 = vrcp.pop %v647
        %v657 = vmul.f32 1.0, %v656
        %v658 = vrcp.pop %v648
        %v659 = vmul.f32 1.0, %v658
        %v660 = vrcp.pop %v649
        %v661 = vmul.f32 1.0, %v660
        %v662 = vrcp.pop %v650
        %v663 = vmul.f32 1.0, %v662
        %v664 = vrcp.pop %v651
        %v665 = vmul.f32 1.0, %v664
        %v666 = vrcp.pop %v652
        %v667 = vmul.f32 1.0, %v666
        %v668 = vrcp.pop %v653
        %v669 = vmul.f32 1.0, %v668
        %v670 = vmul.f32 %v614, %v655
        %v671 = vmul.f32 %v615, %v657
        %v672 = vmul.f32 %v616, %v659
        %v673 = vmul.f32 %v617, %v661
        %v674 = vmul.f32 %v618, %v663
        %v675 = vmul.f32 %v619, %v665
        %v676 = vmul.f32 %v620, %v667
        %v677 = vmul.f32 %v621, %v669
        %686 = vset.pattern.permute.xlu0 0
        %687 = vperm.xlu0 %686, %v670
        %v688 = vpop.permute.xlu0 %687
        %689 = vset.pattern.permute.xlu0 0
        %690 = vperm.xlu0 %689, %v671
        %v691 = vpop.permute.xlu0 %690
        %692 = vset.pattern.permute.xlu0 0
        %693 = vperm.xlu0 %692, %v672
        %v694 = vpop.permute.xlu0 %693
        %695 = vset.pattern.permute.xlu0 0
        %696 = vperm.xlu0 %695, %v673
        %v697 = vpop.permute.xlu0 %696
        %698 = vset.pattern.permute.xlu0 0
        %699 = vperm.xlu0 %698, %v674
        %v700 = vpop.permute.xlu0 %699
        %701 = vset.pattern.permute.xlu0 0
        %702 = vperm.xlu0 %701, %v675
        %v703 = vpop.permute.xlu0 %702
        %704 = vset.pattern.permute.xlu0 0
        %705 = vperm.xlu0 %704, %v676
        %v706 = vpop.permute.xlu0 %705
        %707 = vset.pattern.permute.xlu0 0
        %708 = vperm.xlu0 %707, %v677
        %v709 = vpop.permute.xlu0 %708
        %v710 = vlaneseq
        %v711 = vand.u32 %v710, 127
        %v712 = vlaneseq
        %v713 = vshrl.u32 %v712, 7
        %v714 = vsub.s32 %v711, %v713
        %v715 = vrot.slane %v688, %v714
        %v716 = vlaneseq
        %v717 = vshrl.u32 %v716, 7
        %v718 = vsub.s32 %v711, %v717
        %v719 = vrot.slane %v691, %v718
        %v720 = vlaneseq
        %v721 = vshrl.u32 %v720, 7
        %v722 = vsub.s32 %v711, %v721
        %v723 = vrot.slane %v694, %v722
        %v724 = vlaneseq
        %v725 = vshrl.u32 %v724, 7
        %v726 = vsub.s32 %v711, %v725
        %v727 = vrot.slane %v697, %v726
        %v728 = vlaneseq
        %v729 = vshrl.u32 %v728, 7
        %v730 = vsub.s32 %v711, %v729
        %v731 = vrot.slane %v700, %v730
        %v732 = vlaneseq
        %v733 = vshrl.u32 %v732, 7
        %v734 = vsub.s32 %v711, %v733
        %v735 = vrot.slane %v703, %v734
        %v736 = vlaneseq
        %v737 = vshrl.u32 %v736, 7
        %v738 = vsub.s32 %v711, %v737
        %v739 = vrot.slane %v706, %v738
        %v740 = vlaneseq
        %v741 = vshrl.u32 %v740, 7
        %v742 = vsub.s32 %v711, %v741
        %v743 = vrot.slane %v709, %v742
        %vm744 = vcmask 1041409
        %v745 = vsel %vm744, %v719, %v715
        %vm746 = vcmask 1042434
        %v747 = vsel %vm746, %v723, %v745
        %vm748 = vcmask 1043459
        %v749 = vsel %vm748, %v727, %v747
        %vm750 = vcmask 1044484
        %v751 = vsel %vm750, %v731, %v749
        %vm752 = vcmask 1045509
        %v753 = vsel %vm752, %v735, %v751
        %vm754 = vcmask 1046534
        %v755 = vsel %vm754, %v739, %v753
        %vm756 = vcmask 1047559
        %v757 = vsel %vm756, %v743, %v755
        %vm759 = vcmask 64512
        %v760 = vsel %vm759, %v757, -inf
        %761 = vmax.xlane.f32.xlu0 %v760
        %v762 = vpop.xlane.xlu0 %761
        %v764 = vlaneseq
        %v765 = vshrl.u32 %v764, 7
        %v766 = vsub.s32 0, %v765
        %v767 = vrot.slane %v762, %v766
        %v768 = vlaneseq
        %v769 = vshrl.u32 %v768, 7
        %v770 = vsub.s32 1, %v769
        %v771 = vrot.slane %v762, %v770
        %v772 = vlaneseq
        %v773 = vshrl.u32 %v772, 7
        %v774 = vsub.s32 2, %v773
        %v775 = vrot.slane %v762, %v774
        %v776 = vlaneseq
        %v777 = vshrl.u32 %v776, 7
        %v778 = vsub.s32 3, %v777
        %v779 = vrot.slane %v762, %v778
        %v780 = vlaneseq
        %v781 = vshrl.u32 %v780, 7
        %v782 = vsub.s32 4, %v781
        %v783 = vrot.slane %v762, %v782
        %v784 = vlaneseq
        %v785 = vshrl.u32 %v784, 7
        %v786 = vsub.s32 5, %v785
        %v787 = vrot.slane %v762, %v786
        %v788 = vlaneseq
        %v789 = vshrl.u32 %v788, 7
        %v790 = vsub.s32 6, %v789
        %v791 = vrot.slane %v762, %v790
        %v792 = vlaneseq
        %v793 = vshrl.u32 %v792, 7
        %v794 = vsub.s32 7, %v793
        %v795 = vrot.slane %v762, %v794
        %v804 = vsub.f32 %v670, %v767
        %v805 = vsub.f32 %v671, %v771
        %v806 = vsub.f32 %v672, %v775
        %v807 = vsub.f32 %v673, %v779
        %v808 = vsub.f32 %v674, %v783
        %v809 = vsub.f32 %v675, %v787
        %v810 = vsub.f32 %v676, %v791
        %v811 = vsub.f32 %v677, %v795
        %v812 = vmul.f32 %v804, 1.442695
        %v813 = vpow.pop %v812
        %v814 = vmul.f32 %v805, 1.442695
        %v815 = vpow.pop %v814
        %v816 = vmul.f32 %v806, 1.442695
        %v817 = vpow.pop %v816
        %v818 = vmul.f32 %v807, 1.442695
        %v819 = vpow.pop %v818
        %v820 = vmul.f32 %v808, 1.442695
        %v821 = vpow.pop %v820
        %v822 = vmul.f32 %v809, 1.442695
        %v823 = vpow.pop %v822
        %v824 = vmul.f32 %v810, 1.442695
        %v825 = vpow.pop %v824
        %v826 = vmul.f32 %v811, 1.442695
        %v827 = vpow.pop %v826
        %836 = vset.pattern.permute.xlu0 0
        %837 = vperm.xlu0 %836, %v813
        %v838 = vpop.permute.xlu0 %837
        %839 = vset.pattern.permute.xlu0 0
        %840 = vperm.xlu0 %839, %v815
        %v841 = vpop.permute.xlu0 %840
        %842 = vset.pattern.permute.xlu0 0
        %843 = vperm.xlu0 %842, %v817
        %v844 = vpop.permute.xlu0 %843
        %845 = vset.pattern.permute.xlu0 0
        %846 = vperm.xlu0 %845, %v819
        %v847 = vpop.permute.xlu0 %846
        %848 = vset.pattern.permute.xlu0 0
        %849 = vperm.xlu0 %848, %v821
        %v850 = vpop.permute.xlu0 %849
        %851 = vset.pattern.permute.xlu0 0
        %852 = vperm.xlu0 %851, %v823
        %v853 = vpop.permute.xlu0 %852
        %854 = vset.pattern.permute.xlu0 0
        %855 = vperm.xlu0 %854, %v825
        %v856 = vpop.permute.xlu0 %855
        %857 = vset.pattern.permute.xlu0 0
        %858 = vperm.xlu0 %857, %v827
        %v859 = vpop.permute.xlu0 %858
        %v860 = vlaneseq
        %v861 = vshrl.u32 %v860, 7
        %v862 = vsub.s32 %v711, %v861
        %v863 = vrot.slane %v838, %v862
        %v864 = vlaneseq
        %v865 = vshrl.u32 %v864, 7
        %v866 = vsub.s32 %v711, %v865
        %v867 = vrot.slane %v841, %v866
        %v868 = vlaneseq
        %v869 = vshrl.u32 %v868, 7
        %v870 = vsub.s32 %v711, %v869
        %v871 = vrot.slane %v844, %v870
        %v872 = vlaneseq
        %v873 = vshrl.u32 %v872, 7
        %v874 = vsub.s32 %v711, %v873
        %v875 = vrot.slane %v847, %v874
        %v876 = vlaneseq
        %v877 = vshrl.u32 %v876, 7
        %v878 = vsub.s32 %v711, %v877
        %v879 = vrot.slane %v850, %v878
        %v880 = vlaneseq
        %v881 = vshrl.u32 %v880, 7
        %v882 = vsub.s32 %v711, %v881
        %v883 = vrot.slane %v853, %v882
        %v884 = vlaneseq
        %v885 = vshrl.u32 %v884, 7
        %v886 = vsub.s32 %v711, %v885
        %v887 = vrot.slane %v856, %v886
        %v888 = vlaneseq
        %v889 = vshrl.u32 %v888, 7
        %v890 = vsub.s32 %v711, %v889
        %v891 = vrot.slane %v859, %v890
        %v892 = vsel %vm744, %v867, %v863
        %v893 = vsel %vm746, %v871, %v892
        %v894 = vsel %vm748, %v875, %v893
        %v895 = vsel %vm750, %v879, %v894
        %v896 = vsel %vm752, %v883, %v895
        %v897 = vsel %vm754, %v887, %v896
        %v898 = vsel %vm756, %v891, %v897
        %v900 = vsel %vm759, %v898, 0.0
        %901 = vadd.xlane.f32.xlu0 %v900
        %v902 = vpop.xlane.xlu0 %901
        %v904 = vlaneseq
        %v905 = vshrl.u32 %v904, 7
        %v906 = vsub.s32 0, %v905
        %v907 = vrot.slane %v902, %v906
        %v908 = vlaneseq
        %v909 = vshrl.u32 %v908, 7
        %v910 = vsub.s32 1, %v909
        %v911 = vrot.slane %v902, %v910
        %v912 = vlaneseq
        %v913 = vshrl.u32 %v912, 7
        %v914 = vsub.s32 2, %v913
        %v915 = vrot.slane %v902, %v914
        %v916 = vlaneseq
        %v917 = vshrl.u32 %v916, 7
        %v918 = vsub.s32 3, %v917
        %v919 = vrot.slane %v902, %v918
        %v920 = vlaneseq
        %v921 = vshrl.u32 %v920, 7
        %v922 = vsub.s32 4, %v921
        %v923 = vrot.slane %v902, %v922
        %v924 = vlaneseq
        %v925 = vshrl.u32 %v924, 7
        %v926 = vsub.s32 5, %v925
        %v927 = vrot.slane %v902, %v926
        %v928 = vlaneseq
        %v929 = vshrl.u32 %v928, 7
        %v930 = vsub.s32 6, %v929
        %v931 = vrot.slane %v902, %v930
        %v932 = vlaneseq
        %v933 = vshrl.u32 %v932, 7
        %v934 = vsub.s32 7, %v933
        %v935 = vrot.slane %v902, %v934
        %v944 = vrcp.pop %v907
        %v945 = vmul.f32 %v813, %v944
        %v946 = vrcp.pop %v911
        %v947 = vmul.f32 %v815, %v946
        %v948 = vrcp.pop %v915
        %v949 = vmul.f32 %v817, %v948
        %v950 = vrcp.pop %v919
        %v951 = vmul.f32 %v819, %v950
        %v952 = vrcp.pop %v923
        %v953 = vmul.f32 %v821, %v952
        %v954 = vrcp.pop %v927
        %v955 = vmul.f32 %v823, %v954
        %v956 = vrcp.pop %v931
        %v957 = vmul.f32 %v825, %v956
        %v958 = vrcp.pop %v935
        %v959 = vmul.f32 %v827, %v958
        %961 = vset.pattern.permute.xlu0 0
        %962 = vperm.xlu0 %961, %v945
        %v963 = vpop.permute.xlu0 %962
        %966 = vset.pattern.permute.xlu0 0
        %967 = vperm.xlu0 %966, %v947
        %v968 = vpop.permute.xlu0 %967
        %971 = vset.pattern.permute.xlu0 0
        %972 = vperm.xlu0 %971, %v949
        %v973 = vpop.permute.xlu0 %972
        %976 = vset.pattern.permute.xlu0 0
        %977 = vperm.xlu0 %976, %v951
        %v978 = vpop.permute.xlu0 %977
        %981 = vset.pattern.permute.xlu0 0
        %982 = vperm.xlu0 %981, %v953
        %v983 = vpop.permute.xlu0 %982
        %986 = vset.pattern.permute.xlu0 0
        %987 = vperm.xlu0 %986, %v955
        %v988 = vpop.permute.xlu0 %987
        %991 = vset.pattern.permute.xlu0 0
        %992 = vperm.xlu0 %991, %v957
        %v993 = vpop.permute.xlu0 %992
        %996 = vset.pattern.permute.xlu0 0
        %997 = vperm.xlu0 %996, %v959
        %v998 = vpop.permute.xlu0 %997
        %v1000 = vmul.f32 %v491, %v963
        %v1001 = vmul.f32 %v492, %v968
        %v1002 = vmul.f32 %v493, %v973
        %v1003 = vmul.f32 %v494, %v978
        %v1004 = vmul.f32 %v495, %v983
        %v1005 = vmul.f32 %v496, %v988
        %v1006 = vmul.f32 %v497, %v993
        %v1007 = vmul.f32 %v498, %v998
        %v1008 = vsel %vm478, %v1000, 0.0
        %v1009 = vrot.slane %v1008, 4
        %v1010 = vadd.f32 %v1008, %v1009
        %v1011 = vrot.slane %v1010, 2
        %v1012 = vadd.f32 %v1010, %v1011
        %v1013 = vrot.slane %v1012, 1
        %v1014 = vadd.f32 %v1012, %v1013
        %v1015 = vsel %vm478, %v1001, 0.0
        %v1016 = vrot.slane %v1015, 4
        %v1017 = vadd.f32 %v1015, %v1016
        %v1018 = vrot.slane %v1017, 2
        %v1019 = vadd.f32 %v1017, %v1018
        %v1020 = vrot.slane %v1019, 1
        %v1021 = vadd.f32 %v1019, %v1020
        %v1022 = vsel %vm478, %v1002, 0.0
        %v1023 = vrot.slane %v1022, 4
        %v1024 = vadd.f32 %v1022, %v1023
        %v1025 = vrot.slane %v1024, 2
        %v1026 = vadd.f32 %v1024, %v1025
        %v1027 = vrot.slane %v1026, 1
        %v1028 = vadd.f32 %v1026, %v1027
        %v1029 = vsel %vm478, %v1003, 0.0
        %v1030 = vrot.slane %v1029, 4
        %v1031 = vadd.f32 %v1029, %v1030
        %v1032 = vrot.slane %v1031, 2
        %v1033 = vadd.f32 %v1031, %v1032
        %v1034 = vrot.slane %v1033, 1
        %v1035 = vadd.f32 %v1033, %v1034
        %v1036 = vsel %vm478, %v1004, 0.0
        %v1037 = vrot.slane %v1036, 4
        %v1038 = vadd.f32 %v1036, %v1037
        %v1039 = vrot.slane %v1038, 2
        %v1040 = vadd.f32 %v1038, %v1039
        %v1041 = vrot.slane %v1040, 1
        %v1042 = vadd.f32 %v1040, %v1041
        %v1043 = vsel %vm478, %v1005, 0.0
        %v1044 = vrot.slane %v1043, 4
        %v1045 = vadd.f32 %v1043, %v1044
        %v1046 = vrot.slane %v1045, 2
        %v1047 = vadd.f32 %v1045, %v1046
        %v1048 = vrot.slane %v1047, 1
        %v1049 = vadd.f32 %v1047, %v1048
        %v1050 = vsel %vm478, %v1006, 0.0
        %v1051 = vrot.slane %v1050, 4
        %v1052 = vadd.f32 %v1050, %v1051
        %v1053 = vrot.slane %v1052, 2
        %v1054 = vadd.f32 %v1052, %v1053
        %v1055 = vrot.slane %v1054, 1
        %v1056 = vadd.f32 %v1054, %v1055
        %v1057 = vsel %vm478, %v1007, 0.0
        %v1058 = vrot.slane %v1057, 4
        %v1059 = vadd.f32 %v1057, %v1058
        %v1060 = vrot.slane %v1059, 2
        %v1061 = vadd.f32 %v1059, %v1060
        %v1062 = vrot.slane %v1061, 1
        %v1063 = vadd.f32 %v1061, %v1062
        %v1072 = vsel %vm744, %v1021, %v1014
        %v1073 = vsel %vm746, %v1028, %v1072
        %v1074 = vsel %vm748, %v1035, %v1073
        %v1075 = vsel %vm750, %v1042, %v1074
        %v1076 = vsel %vm752, %v1049, %v1075
        %v1077 = vsel %vm754, %v1056, %v1076
        %v1078 = vsel %vm756, %v1063, %v1077
        %v1080 = vadd.f32 %v469, %v1078
        %v1081 = vxor.u32 %v1080, 2147483648
        %v1082 = vmul.f32 %v1081, 1.442695
        %v1083 = vpow.pop %v1082
        %v1084 = vadd.f32 %v1083, 1.0
        %v1085 = vrcp.pop %v1084
        %v1086 = vmul.f32 1.0, %v1085
        %v1087 = vmul.f32 %v1080, %v1086
        %v1088 = vld [vmem:[#allocation12] sm:$0xff]
        %v1089 = vld [vmem:[#allocation12 + $0x8] sm:$0xff]
        %v1090 = vld [vmem:[#allocation12 + $0x10] sm:$0xff]
        %v1091 = vld [vmem:[#allocation12 + $0x18] sm:$0xff]
        %v1092 = vld [vmem:[#allocation12 + $0x20] sm:$0xff]
        %v1093 = vld [vmem:[#allocation12 + $0x28] sm:$0xff]
        %v1094 = vld [vmem:[#allocation12 + $0x30] sm:$0xff]
        %v1095 = vld [vmem:[#allocation12 + $0x38] sm:$0xff]
        %v1096 = vld [vmem:[#allocation12 + $0x40] sm:$0xff]
        %v1097 = vld [vmem:[#allocation12 + $0x48] sm:$0xff]
        %v1098 = vld [vmem:[#allocation12 + $0x50] sm:$0xff]
        %v1099 = vld [vmem:[#allocation12 + $0x58] sm:$0xff]
        %v1100 = vld [vmem:[#allocation12 + $0x60] sm:$0xff]
        %v1101 = vld [vmem:[#allocation12 + $0x68] sm:$0xff]
        %v1102 = vld [vmem:[#allocation12 + $0x70] sm:$0xff]
        %v1103 = vld [vmem:[#allocation12 + $0x78] sm:$0xff]
        %v1104 = vld [vmem:[#allocation12 + $0x80] sm:$0xff]
        %v1105 = vld [vmem:[#allocation12 + $0x88] sm:$0xff]
        %v1106 = vld [vmem:[#allocation12 + $0x90] sm:$0xff]
        %v1107 = vld [vmem:[#allocation12 + $0x98] sm:$0xff]
        %v1108 = vld [vmem:[#allocation12 + $0xa0] sm:$0xff]
        %v1109 = vld [vmem:[#allocation12 + $0xa8] sm:$0xff]
        %v1110 = vld [vmem:[#allocation12 + $0xb0] sm:$0xff]
        %v1111 = vld [vmem:[#allocation12 + $0xb8] sm:$0xff]
        %v1112 = vld [vmem:[#allocation14] sm:$0x7]
        %v1114 = vlaneseq
        %v1115 = vshrl.u32 %v1114, 7
        %v1116 = vsub.s32 0, %v1115
        %v1117 = vrot.slane %v1112, %v1116
        %v1118 = vlaneseq
        %v1119 = vshrl.u32 %v1118, 7
        %v1120 = vsub.s32 1, %v1119
        %v1121 = vrot.slane %v1112, %v1120
        %v1122 = vlaneseq
        %v1123 = vshrl.u32 %v1122, 7
        %v1124 = vsub.s32 2, %v1123
        %v1125 = vrot.slane %v1112, %v1124
        %v1130 = vsel %vm478, %v1087, 0
        %1132 = vmatprep.subr.mxu0 %v1089
        %1133 = vmatpush1.msra.mxu0 %v1088
        %1134 = vmatprep.subr.mxu0 %v1092
        %1135 = vmatpush1.msra.mxu0 %v1091
        %1136 = vmatprep.subr.mxu0 %v1095
        %1137 = vmatpush1.msra.mxu0 %v1094
        %1138 = vmatprep.subr.mxu0 %v1098
        %1139 = vmatpush1.msra.mxu0 %v1097
        %1140 = vmatprep.subr.mxu0 %v1101
        %1141 = vmatpush1.msra.mxu0 %v1100
        %1142 = vmatprep.subr.mxu0 %v1104
        %1143 = vmatpush1.msra.mxu0 %v1103
        %1144 = vmatprep.subr.mxu0 %v1107
        %1145 = vmatpush1.msra.mxu0 %v1106
        %1146 = vmatprep.subr.mxu0 %v1110
        %1147 = vmatpush1.msra.mxu0 %v1109
        %1148 = vmatprep.subr.mxu0 0.0
        %1149 = vmatpush1.msra.mxu0 0.0
        %1150 = vmatprep.subr.mxu0 0.0
        %1151 = vmatpush1.msra.mxu0 0.0
        %1152 = vmatprep.subr.mxu0 0.0
        %1153 = vmatpush1.msra.mxu0 0.0
        %1154 = vmatprep.subr.mxu0 0.0
        %1155 = vmatpush1.msra.mxu0 0.0
        %1156 = vmatprep.subr.mxu0 0.0
        %1157 = vmatpush1.msra.mxu0 0.0
        %1158 = vmatprep.subr.mxu0 0.0
        %1159 = vmatpush1.msra.mxu0 0.0
        %1160 = vmatprep.subr.mxu0 0.0
        %1161 = vmatpush1.msra.mxu0 0.0
        %1162 = vmatprep.subr.mxu0 0.0
        %1163 = vmatpush1.msra.mxu0 0.0
        %1164 = vmatprep.subr.mxu0 0.0
        %1165 = vmatpush1.msra.mxu0 0.0
        %1166 = vmatprep.subr.mxu0 0.0
        %1167 = vmatpush1.msra.mxu0 0.0
        %1168 = vmatprep.subr.mxu0 0.0
        %1169 = vmatpush1.msra.mxu0 0.0
        %1170 = vmatprep.subr.mxu0 0.0
        %1171 = vmatpush1.msra.mxu0 0.0
        %1172 = vmatprep.subr.mxu0 0.0
        %1173 = vmatpush1.msra.mxu0 0.0
        %1174 = vmatprep.subr.mxu0 0.0
        %1175 = vmatpush1.msra.mxu0 0.0
        %1176 = vmatprep.subr.mxu0 0.0
        %1177 = vmatpush1.msra.mxu0 0.0
        %1178 = vmatprep.subr.mxu0 0.0
        %1179 = vmatpush1.msra.mxu0 0.0
        %1180 = vmatprep.subr.mxu0 0.0
        %1181 = vmatpush1.msra.mxu0 0.0
        %1182 = vmatprep.subr.mxu0 0.0
        %1183 = vmatpush1.msra.mxu0 0.0
        %1184 = vmatprep.subr.mxu0 0.0
        %1185 = vmatpush1.msra.mxu0 0.0
        %1186 = vmatprep.subr.mxu0 0.0
        %1187 = vmatpush1.msra.mxu0 0.0
        %1188 = vmatprep.subr.mxu0 0.0
        %1189 = vmatpush1.msra.mxu0 0.0
        %1190 = vmatprep.subr.mxu0 0.0
        %1191 = vmatpush1.msra.mxu0 0.0
        %1192 = vmatprep.subr.mxu0 0.0
        %1193 = vmatpush1.msra.mxu0 0.0
        %1194 = vmatprep.subr.mxu0 0.0
        %1195 = vmatpush1.msra.mxu0 0.0
        %1196 = vmatprep.mubr.f32.mxu0 0.0
        %1197 = vmatmul.mubr.f32.gmra.mrb[0].mxu0 %v1130
        %v1198 = vpop.f32.mrb[0].mxu0
        %v1199 = vadd.f32 %v1117, %v1198
        %v1200 = vpop.f32.mrb[0].mxu0
        %v1201 = vadd.f32 %v1121, %v1200
        %1202 = vdwg.mxu0
        %1203 = vmatprep.subr.mxu0 0.0
        %1204 = vmatpush1.msra.mxu0 %v1090
        %1205 = vmatprep.subr.mxu0 0.0
        %1206 = vmatpush1.msra.mxu0 %v1093
        %1207 = vmatprep.subr.mxu0 0.0
        %1208 = vmatpush1.msra.mxu0 %v1096
        %1209 = vmatprep.subr.mxu0 0.0
        %1210 = vmatpush1.msra.mxu0 %v1099
        %1211 = vmatprep.subr.mxu0 0.0
        %1212 = vmatpush1.msra.mxu0 %v1102
        %1213 = vmatprep.subr.mxu0 0.0
        %1214 = vmatpush1.msra.mxu0 %v1105
        %1215 = vmatprep.subr.mxu0 0.0
        %1216 = vmatpush1.msra.mxu0 %v1108
        %1217 = vmatprep.subr.mxu0 0.0
        %1218 = vmatpush1.msra.mxu0 %v1111
        %1219 = vmatprep.subr.mxu0 0.0
        %1220 = vmatpush1.msra.mxu0 0.0
        %1221 = vmatprep.subr.mxu0 0.0
        %1222 = vmatpush1.msra.mxu0 0.0
        %1223 = vmatprep.subr.mxu0 0.0
        %1224 = vmatpush1.msra.mxu0 0.0
        %1225 = vmatprep.subr.mxu0 0.0
        %1226 = vmatpush1.msra.mxu0 0.0
        %1227 = vmatprep.subr.mxu0 0.0
        %1228 = vmatpush1.msra.mxu0 0.0
        %1229 = vmatprep.subr.mxu0 0.0
        %1230 = vmatpush1.msra.mxu0 0.0
        %1231 = vmatprep.subr.mxu0 0.0
        %1232 = vmatpush1.msra.mxu0 0.0
        %1233 = vmatprep.subr.mxu0 0.0
        %1234 = vmatpush1.msra.mxu0 0.0
        %1235 = vmatprep.subr.mxu0 0.0
        %1236 = vmatpush1.msra.mxu0 0.0
        %1237 = vmatprep.subr.mxu0 0.0
        %1238 = vmatpush1.msra.mxu0 0.0
        %1239 = vmatprep.subr.mxu0 0.0
        %1240 = vmatpush1.msra.mxu0 0.0
        %1241 = vmatprep.subr.mxu0 0.0
        %1242 = vmatpush1.msra.mxu0 0.0
        %1243 = vmatprep.subr.mxu0 0.0
        %1244 = vmatpush1.msra.mxu0 0.0
        %1245 = vmatprep.subr.mxu0 0.0
        %1246 = vmatpush1.msra.mxu0 0.0
        %1247 = vmatprep.subr.mxu0 0.0
        %1248 = vmatpush1.msra.mxu0 0.0
        %1249 = vmatprep.subr.mxu0 0.0
        %1250 = vmatpush1.msra.mxu0 0.0
        %1251 = vmatprep.subr.mxu0 0.0
        %1252 = vmatpush1.msra.mxu0 0.0
        %1253 = vmatprep.subr.mxu0 0.0
        %1254 = vmatpush1.msra.mxu0 0.0
        %1255 = vmatprep.subr.mxu0 0.0
        %1256 = vmatpush1.msra.mxu0 0.0
        %1257 = vmatprep.subr.mxu0 0.0
        %1258 = vmatpush1.msra.mxu0 0.0
        %1259 = vmatprep.subr.mxu0 0.0
        %1260 = vmatpush1.msra.mxu0 0.0
        %1261 = vmatprep.subr.mxu0 0.0
        %1262 = vmatpush1.msra.mxu0 0.0
        %1263 = vmatprep.subr.mxu0 0.0
        %1264 = vmatpush1.msra.mxu0 0.0
        %1265 = vmatprep.subr.mxu0 0.0
        %1266 = vmatpush1.msra.mxu0 0.0
        %1267 = vmatprep.mubr.f32.mxu0 0.0
        %1268 = vmatmul.mubr.f32.gmra.mrb[0].mxu0 %v1130
        %v1269 = vpop.f32.mrb[0].mxu0
        %v1270 = vadd.f32 %v1125, %v1269
        %v1271 = vpop.f32.mrb[0].mxu0
        %1272 = vdwg.mxu0
        %1273 = vst [vmem:[%s466] sm:$0xff] %v1199
        %1274 = vst [vmem:[%s466 + $0x8] sm:$0xff] %v1201
        %1275 = vst [vmem:[%s466 + $0x10] sm:$0xff] %v1270
        %s1276 = sand.u32 %s241, 1
        %s1277 = scalar_lea.sflag [#allocation5], %s1276
        %s1278 = sand.u32 %s241, 1
        %s1279 = smul.addr %s1278, 24
        %s1280 = scalar_lea.vmem [#allocation15], %s1279
        // Predicated region
        $region81: #{adaln_forward.1} parent=51 // pred_check
          %p1281 = pneg %p251
        $region82: #{adaln_forward.1} parent=51 // pred_check_branch
          %1283 = sbr.rel (%p1281) target = $region84
        $region83: #{adaln_forward.1} parent=51 // pred_region
          %s1285 = ssub.s32 384, 384
          %1286 = vsyncadd %s1277, %s1285
          %s1287 = smul.addr %s37, 3
          %s1288 = smul.addr %s36, 3
          %s1289 = sadd.s32 %s1287, %s1288
          %s1290 = smul.addr %s1289, 128
          %s1291 = scalar_lea.hbm %s8, %s1290
          %s1293 = sshll.u32 %s1280, 4
          %s1294 = int_to_ptr.vmem [resolvable:$true] %s1293
          %1296 = dma.vmem_to_hbm [thread:$0]  %s1294, 384, %s1291, %s1277
        $region84: #{adaln_forward.1} parent=51 // pred_fallthru
          _
      $region52: #{adaln_forward.1} parent=5 // pred_fallthru
        _
      %p1297 = scmp.le.s32.totalorder 2, %s27
      // Predicated region
      $region85: #{adaln_forward.1} parent=5 // pred_check
        %p1298 = pneg %p1297
      $region86: #{adaln_forward.1} parent=5 // pred_check_branch
        %1300 = sbr.rel (%p1298) target = $region88
      $region87: #{adaln_forward.1} parent=5 // pred_region
        %s1301 = ssub.s32 %s27, 2
        // Predicated region
        $region89: #{adaln_forward.1} parent=87 // pred_check
          %p1302 = pneg %p257
        $region90: #{adaln_forward.1} parent=87 // pred_check_branch
          %1304 = sbr.rel (%p1302) target = $region92
        $region91: #{adaln_forward.1} parent=87 // pred_region
          %s1305 = sand.u32 %s242, 1
          %s1306 = scalar_lea.sflag [#allocation5], %s1305
          %s1307 = sand.u32 %s242, 1
          %s1308 = smul.addr %s1307, 24
          %s1309 = scalar_lea.vmem [#allocation15], %s1308
          %1310 = dma.done %s1306, 384
        $region92: #{adaln_forward.1} parent=87 // pred_fallthru
          _
      $region88: #{adaln_forward.1} parent=5 // pred_fallthru
        _
    $region6: #{adaln_forward.1} parent=1 // loop_footer
      %s31 = sadd.s32 1, %s27
    $region7: #{adaln_forward.1} parent=1 // loop_footer_branch
      %26 = sbr.rel target = $region3
    $region8: #{adaln_forward.1} parent=1 // loop_exit
      _
    %1311 = vsyncpa [#allocation4], 1
    %s1312 = scalar_lea.sflag [#allocation4], 1
    %1313 = vsyncpa %s1312, 1
    %1314 = vsyncpa [#allocation7], 1
    %s1315 = scalar_lea.sflag [#allocation7], 1
    %1316 = vsyncpa %s1315, 1
    %1317 = vsyncpa [#allocation10], 1
    %1318 = vsyncpa [#allocation13], 1
    %1319 = vsyncpa [#allocation5], 1
    %s1320 = scalar_lea.sflag [#allocation5], 1
    %1321 = vsyncpa %s1320, 1

</llo_original>
